<compile_context>
chip_gen: v7x
topology: tpu7x:2x2x1
jax: 0.10.0
libtpu: 0.0.40
codegen_flags: <defaults>
</compile_context>

<pallas_src>
import math

import jax
import jax.numpy as jnp
from jax.experimental import pallas as pl
from jax.experimental.pallas import tpu as pltpu

# ---- small synthetic config (block_size == T) ----
B, T, C, N_HEAD = 2, 8, 32, 4
HEAD_DIM = C // N_HEAD


def _attn_kernel(x_ref, wqkv_ref, bqkv_ref, wp_ref, bp_ref, y_ref, kv_ref):
    """Whole batch handled in one grid step; all tiles VMEM-resident."""
    Bb, Tt, Cc = x_ref.shape
    NH, HD = N_HEAD, HEAD_DIM

    # ---- Fused QKV projection: one [B*T, C] @ [C, 3C] MXU matmul for the whole batch.
    #      (softmax scale is already folded into the q columns of wqkv/bqkv.)
    x2 = x_ref[...].reshape(Bb * Tt, Cc)
    qkv = jnp.dot(x2, wqkv_ref[...], preferred_element_type=jnp.float32) + bqkv_ref[...]  # [B*T, 3C]

    # ---- Lane-dense "present" cache: single [B, T, 2C] (k|v) store.
    kv_ref[...] = qkv[:, Cc:].reshape(Bb, Tt, 2 * Cc)

    # ---- Head-major relayout for q, k, v together: one reshape + one transpose
    #      (no per-head lane slices, no jnp.stack).
    qkvh = qkv.reshape(Bb, Tt, 3 * NH, HD)
    qkvh = jnp.transpose(qkvh, (0, 2, 1, 3))                    # [B, 3*NH, T, HD]
    q = qkvh[:, 0 * NH:1 * NH].reshape(Bb * NH, Tt, HD)         # already scaled
    k = qkvh[:, 1 * NH:2 * NH].reshape(Bb * NH, Tt, HD)
    v = qkvh[:, 2 * NH:3 * NH].reshape(Bb * NH, Tt, HD)

    # ---- Causal additive bias built in-kernel (no [T, T] mask DMA).  Large finite
    #      negative instead of -inf so a fully-masked row can never produce NaN.
    row = jax.lax.broadcasted_iota(jnp.int32, (Tt, Tt), 0)
    col = jax.lax.broadcasted_iota(jnp.int32, (Tt, Tt), 1)
    bias = jnp.where(row >= col, 0.0, -1e30).astype(jnp.float32)  # [T, T]

    # ---- Scores + softmax for all (batch, head) pairs in one batched matmul.
    att = jnp.einsum("nqd,nkd->nqk", q, k, preferred_element_type=jnp.float32) + bias
    att = att - jnp.max(att, axis=-1, keepdims=True)
    e = jnp.exp(att)
    p = e * pl.reciprocal(jnp.sum(e, axis=-1, keepdims=True), approx=True)  # EUP divide

    # ---- Weighted values (one batched matmul), head re-concat, fused output projection:
    #      one [B*T, C] @ [C, C] matmul contracts over all heads at once.
    yh = jnp.einsum("nqk,nkd->nqd", p, v, preferred_element_type=jnp.float32)  # [B*NH, T, HD]
    y2 = jnp.transpose(yh.reshape(Bb, NH, Tt, HD), (0, 2, 1, 3)).reshape(Bb * Tt, Cc)
    y = jnp.dot(y2, wp_ref[...], preferred_element_type=jnp.float32) + bp_ref[...]
    y_ref[...] = y.reshape(Bb, Tt, Cc)


def causal_self_attention(x, wq, bq, wk, bk, wv, bv, wp, bp):
    """x: [B, T, C]; w*: [C, C] stored [in, out] (transposed vs torch); b*: [C].

    Returns (y [B, T, C], present [2, B, n_head, T, head_dim]).
    """
    # Weight packing in the wrapper is free at trace time.  Softmax scale folded into
    # the q projection (k/v — and hence the "present" cache — are untouched).
    scale = 1.0 / math.sqrt(HEAD_DIM)
    wqkv = jnp.concatenate([wq * scale, wk, wv], axis=1)           # [C, 3C]
    bqkv = jnp.concatenate([bq * scale, bk, bv], axis=0)[None, :]  # [1, 3C]
    bp2 = bp[None, :]                                              # [1, C]

    y, kv = pl.pallas_call(
        _attn_kernel,
        out_shape=(
            jax.ShapeDtypeStruct((B, T, C), jnp.float32),
            jax.ShapeDtypeStruct((B, T, 2 * C), jnp.float32),
        ),
        grid=(1,),
        in_specs=[
            pl.BlockSpec((B, T, C), lambda i: (0, 0, 0)),      # x
            pl.BlockSpec((C, 3 * C), lambda i: (0, 0)),        # fused wqkv (q pre-scaled)
            pl.BlockSpec((1, 3 * C), lambda i: (0, 0)),        # fused bqkv
            pl.BlockSpec((C, C), lambda i: (0, 0)),            # wp
            pl.BlockSpec((1, C), lambda i: (0, 0)),            # bp
        ],
        out_specs=(
            pl.BlockSpec((B, T, C), lambda i: (0, 0, 0)),      # y
            pl.BlockSpec((B, T, 2 * C), lambda i: (0, 0, 0)),  # present (k|v), lane-dense
        ),
        compiler_params=pltpu.CompilerParams(dimension_semantics=("arbitrary",)),
    )(x, wqkv, bqkv, wp, bp2)

    # Head split of the "present" cache done in the wrapper (kernel stores stay lane-dense).
    def to_heads(z):  # [B, T, C] -> [B, nh, T, hd]
        return z.reshape(B, T, N_HEAD, HEAD_DIM).transpose(0, 2, 1, 3)

    present = jnp.stack((to_heads(kv[..., :C]), to_heads(kv[..., C:])))  # [2, B, nh, T, hd]
    return y, present


def _reference(x, wq, bq, wk, bk, wv, bv, wp, bp):
    """Pure-JAX reference mirroring the PyTorch forward (eval mode)."""
    Bb, Tt, Cc = x.shape
    hd = Cc // N_HEAD

    def split_heads(z):  # [B, T, C] -> [B, nh, T, hd]
        return z.reshape(Bb, Tt, N_HEAD, hd).transpose(0, 2, 1, 3)

    q = split_heads(x @ wq + bq)
    k = split_heads(x @ wk + bk)
    v = split_heads(x @ wv + bv)
    present = jnp.stack((k, v))
    mask = jnp.tril(jnp.ones((Tt, Tt), dtype=jnp.float32))
    att = jnp.einsum("bhtd,bhsd->bhts", q, k) * (1.0 / math.sqrt(hd))
    att = jnp.where(mask[None, None] == 0.0, -jnp.inf, att)
    att = jax.nn.softmax(att, axis=-1)
    y = jnp.einsum("bhts,bhsd->bhtd", att, v)
    y = y.transpose(0, 2, 1, 3).reshape(Bb, Tt, Cc)
    y = y @ wp + bp
    return y, present


if __name__ == "__main__":
    key = jax.random.PRNGKey(0)
    ks = jax.random.split(key, 9)

    x = jax.random.normal(ks[0], (B, T, C), dtype=jnp.float32)

    # Deterministic parameter init; weights stored [in, out] (transposed vs torch
    # nn.Linear's [out, in]).
    def init_w(k):
        return jax.random.normal(k, (C, C), dtype=jnp.float32) * 0.02

    def init_b(k):
        return jax.random.normal(k, (C,), dtype=jnp.float32) * 0.02

    wq, wk, wv, wp = init_w(ks[1]), init_w(ks[2]), init_w(ks[3]), init_w(ks[4])
    bq, bk, bv, bp = init_b(ks[5]), init_b(ks[6]), init_b(ks[7]), init_b(ks[8])

    y, present = causal_self_attention(x, wq, bq, wk, bk, wv, bv, wp, bp)
    jax.block_until_ready((y, present))

    y_ref, present_ref = _reference(x, wq, bq, wk, bk, wv, bv, wp, bp)
    assert y.shape == (B, T, C)
    assert present.shape == (2, B, N_HEAD, T, HEAD_DIM)
    # y uses the EUP approximate reciprocal for the softmax denominator (~bf16-accurate),
    # so its tolerance is loosened; the k/v "present" path is exact.
    assert jnp.allclose(y, y_ref, atol=2e-3, rtol=2e-3)
    assert jnp.allclose(present, present_ref, atol=1e-5, rtol=1e-5)

    print("KERNEL_OK")
</pallas_src>

<mosaic_0001>
module attributes {stable_mosaic.version = 11 : i64} {
  func.func @_attn_kernel(%arg0: i32, %arg1: memref<2x8x32xf32, #tpu.memory_space<vmem>>, %arg2: memref<32x96xf32, #tpu.memory_space<vmem>>, %arg3: memref<1x96xf32, #tpu.memory_space<vmem>>, %arg4: memref<32x32xf32, #tpu.memory_space<vmem>>, %arg5: memref<1x32xf32, #tpu.memory_space<vmem>>, %arg6: memref<2x8x32xf32, #tpu.memory_space<vmem>>, %arg7: memref<2x8x64xf32, #tpu.memory_space<vmem>>) attributes {dimension_semantics = [#tpu.dimension_semantics<arbitrary>], iteration_bounds = array<i64: 1>, scalar_prefetch = 0 : i64, scratch_operands = 0 : i64, tpu.core_type = #tpu.core_type<tc>, window_params = [{pipeline_mode = #tpu.pipeline_mode<synchronous>, transform_indices = @transform_0, window_bounds = array<i64: 2, 8, 32>}, {pipeline_mode = #tpu.pipeline_mode<synchronous>, transform_indices = @transform_1, window_bounds = array<i64: 32, 96>}, {pipeline_mode = #tpu.pipeline_mode<synchronous>, transform_indices = @transform_2, window_bounds = array<i64: 1, 96>}, {pipeline_mode = #tpu.pipeline_mode<synchronous>, transform_indices = @transform_3, window_bounds = array<i64: 32, 32>}, {pipeline_mode = #tpu.pipeline_mode<synchronous>, transform_indices = @transform_4, window_bounds = array<i64: 1, 32>}, {pipeline_mode = #tpu.pipeline_mode<synchronous>, transform_indices = @transform_5, window_bounds = array<i64: 2, 8, 32>}, {pipeline_mode = #tpu.pipeline_mode<synchronous>, transform_indices = @transform_6, window_bounds = array<i64: 2, 8, 64>}]} {
    %c0 = arith.constant 0 : index
    %c0_0 = arith.constant 0 : index
    %c0_1 = arith.constant 0 : index
    %0 = vector.load %arg1[%c0, %c0_0, %c0_1] : memref<2x8x32xf32, #tpu.memory_space<vmem>>, vector<2x8x32xf32>
    %1 = vector.shape_cast %0 : vector<2x8x32xf32> to vector<16x32xf32>
    %c0_2 = arith.constant 0 : index
    %c0_3 = arith.constant 0 : index
    %2 = vector.load %arg2[%c0_2, %c0_3] : memref<32x96xf32, #tpu.memory_space<vmem>>, vector<32x96xf32>
    %cst = arith.constant dense<0.000000e+00> : vector<16x96xf32>
    %3 = tpu.matmul %1, %2, %cst {dimension_numbers = #tpu.dot_dimension_numbers<[1], [0], [0], [1], [0, 0, 1, 1], [], []>} : vector<16x32xf32>, vector<32x96xf32>, vector<16x96xf32> -> vector<16x96xf32>
    %c0_4 = arith.constant 0 : index
    %c0_5 = arith.constant 0 : index
    %4 = vector.load %arg3[%c0_4, %c0_5] : memref<1x96xf32, #tpu.memory_space<vmem>>, vector<1x96xf32>
    %5 = vector.broadcast %4 : vector<1x96xf32> to vector<16x96xf32>
    %6 = arith.addf %3, %5 : vector<16x96xf32>
    %7 = vector.extract_strided_slice %6 {offsets = [0, 32], sizes = [16, 64], strides = [1, 1]} : vector<16x96xf32> to vector<16x64xf32>
    %8 = vector.shape_cast %7 : vector<16x64xf32> to vector<2x8x64xf32>
    %c0_6 = arith.constant 0 : index
    %c0_7 = arith.constant 0 : index
    %c0_8 = arith.constant 0 : index
    %9 = vector.load %arg7[%c0_6, %c0_7, %c0_8] : memref<2x8x64xf32, #tpu.memory_space<vmem>>, vector<2x8x64xf32>
    tpu.vector_store %arg7[%c0_6, %c0_7, %c0_8], %8 {strides = array<i32>} : memref<2x8x64xf32, #tpu.memory_space<vmem>>, vector<2x8x64xf32>,
    %10 = vector.shape_cast %6 : vector<16x96xf32> to vector<2x8x12x8xf32>
    %11 = tpu.transpose %10, [0, 2, 1, 3] : vector<2x8x12x8xf32> -> vector<2x12x8x8xf32>
    %12 = vector.extract_strided_slice %11 {offsets = [0, 0, 0, 0], sizes = [2, 4, 8, 8], strides = [1, 1, 1, 1]} : vector<2x12x8x8xf32> to vector<2x4x8x8xf32>
    %13 = vector.shape_cast %12 : vector<2x4x8x8xf32> to vector<8x8x8xf32>
    %14 = vector.extract_strided_slice %11 {offsets = [0, 4, 0, 0], sizes = [2, 4, 8, 8], strides = [1, 1, 1, 1]} : vector<2x12x8x8xf32> to vector<2x4x8x8xf32>
    %15 = vector.shape_cast %14 : vector<2x4x8x8xf32> to vector<8x8x8xf32>
    %16 = vector.extract_strided_slice %11 {offsets = [0, 8, 0, 0], sizes = [2, 4, 8, 8], strides = [1, 1, 1, 1]} : vector<2x12x8x8xf32> to vector<2x4x8x8xf32>
    %17 = vector.shape_cast %16 : vector<2x4x8x8xf32> to vector<8x8x8xf32>
    %18 = tpu.iota {dimensions = array<i32: 0>} : vector<8x8xi32>
    %19 = tpu.iota {dimensions = array<i32: 1>} : vector<8x8xi32>
    %20 = arith.cmpi sge, %18, %19 : vector<8x8xi32>
    %cst_9 = arith.constant 0.000000e+00 : f32
    %cst_10 = arith.constant -1.000000e+30 : f32
    %21 = vector.broadcast %cst_9 : f32 to vector<8x8xf32>
    %22 = vector.broadcast %cst_10 : f32 to vector<8x8xf32>
    %23 = arith.select %20, %21, %22 : vector<8x8xi1>, vector<8x8xf32>
    "tpu.trace_start"() <{level = 10 : i32, message = "nqd,nkd->nqk"}> : () -> ()
    %cst_11 = arith.constant dense<0.000000e+00> : vector<8x8x8xf32>
    %24 = tpu.matmul %13, %15, %cst_11 {dimension_numbers = #tpu.dot_dimension_numbers<[2], [2], [1], [1], [0, 0, 0, 1, 1, 1], [0], [0]>} : vector<8x8x8xf32>, vector<8x8x8xf32>, vector<8x8x8xf32> -> vector<8x8x8xf32>
    "tpu.trace_stop"() : () -> ()
    %25 = vector.shape_cast %23 : vector<8x8xf32> to vector<1x8x8xf32>
    %26 = vector.broadcast %25 : vector<1x8x8xf32> to vector<8x8x8xf32>
    %27 = arith.addf %24, %26 : vector<8x8x8xf32>
    %cst_12 = arith.constant dense<0xFF800000> : vector<8x8xf32>
    %28 = vector.multi_reduction <maximumf>, %27, %cst_12 [2] : vector<8x8x8xf32> to vector<8x8xf32>
    %29 = vector.shape_cast %28 : vector<8x8xf32> to vector<8x8x1xf32>
    %30 = vector.broadcast %29 : vector<8x8x1xf32> to vector<8x8x8xf32>
    %31 = arith.subf %27, %30 : vector<8x8x8xf32>
    %32 = math.exp %31 : vector<8x8x8xf32>
    %cst_13 = arith.constant dense<0.000000e+00> : vector<8x8xf32>
    %33 = vector.multi_reduction <add>, %32, %cst_13 [2] : vector<8x8x8xf32> to vector<8x8xf32>
    %34 = vector.shape_cast %33 : vector<8x8xf32> to vector<8x8x1xf32>
    %35 = tpu.reciprocal %34 {approx = true} : vector<8x8x1xf32> -> vector<8x8x1xf32>
    %36 = vector.broadcast %35 : vector<8x8x1xf32> to vector<8x8x8xf32>
    %37 = arith.mulf %32, %36 : vector<8x8x8xf32>
    "tpu.trace_start"() <{level = 10 : i32, message = "nqk,nkd->nqd"}> : () -> ()
    %cst_14 = arith.constant dense<0.000000e+00> : vector<8x8x8xf32>
    %38 = tpu.matmul %37, %17, %cst_14 {dimension_numbers = #tpu.dot_dimension_numbers<[2], [1], [1], [2], [0, 0, 0, 1, 1, 2], [0], [0]>} : vector<8x8x8xf32>, vector<8x8x8xf32>, vector<8x8x8xf32> -> vector<8x8x8xf32>
    "tpu.trace_stop"() : () -> ()
    %39 = vector.shape_cast %38 : vector<8x8x8xf32> to vector<2x4x8x8xf32>
    %40 = tpu.transpose %39, [0, 2, 1, 3] : vector<2x4x8x8xf32> -> vector<2x8x4x8xf32>
    %41 = vector.shape_cast %40 : vector<2x8x4x8xf32> to vector<16x32xf32>
    %c0_15 = arith.constant 0 : index
    %c0_16 = arith.constant 0 : index
    %42 = vector.load %arg4[%c0_15, %c0_16] : memref<32x32xf32, #tpu.memory_space<vmem>>, vector<32x32xf32>
    %cst_17 = arith.constant dense<0.000000e+00> : vector<16x32xf32>
    %43 = tpu.matmul %41, %42, %cst_17 {dimension_numbers = #tpu.dot_dimension_numbers<[1], [0], [0], [1], [0, 0, 1, 1], [], []>} : vector<16x32xf32>, vector<32x32xf32>, vector<16x32xf32> -> vector<16x32xf32>
    %c0_18 = arith.constant 0 : index
    %c0_19 = arith.constant 0 : index
    %44 = vector.load %arg5[%c0_18, %c0_19] : memref<1x32xf32, #tpu.memory_space<vmem>>, vector<1x32xf32>
    %45 = vector.broadcast %44 : vector<1x32xf32> to vector<16x32xf32>
    %46 = arith.addf %43, %45 : vector<16x32xf32>
    %47 = vector.shape_cast %46 : vector<16x32xf32> to vector<2x8x32xf32>
    %c0_20 = arith.constant 0 : index
    %c0_21 = arith.constant 0 : index
    %c0_22 = arith.constant 0 : index
    %48 = vector.load %arg6[%c0_20, %c0_21, %c0_22] : memref<2x8x32xf32, #tpu.memory_space<vmem>>, vector<2x8x32xf32>
    tpu.vector_store %arg6[%c0_20, %c0_21, %c0_22], %47 {strides = array<i32>} : memref<2x8x32xf32, #tpu.memory_space<vmem>>, vector<2x8x32xf32>,
    return
  }
  func.func @transform_0(%arg0: i32) -> (i32, i32, i32) {
    %c0_i32 = arith.constant 0 : i32
    %c0_i32_0 = arith.constant 0 : i32
    %c0_i32_1 = arith.constant 0 : i32
    %c0_i32_2 = arith.constant 0 : i32
    return %c0_i32, %c0_i32_0, %c0_i32_1 : i32, i32, i32
  }
  func.func @transform_1(%arg0: i32) -> (i32, i32) {
    %c0_i32 = arith.constant 0 : i32
    %c0_i32_0 = arith.constant 0 : i32
    %c0_i32_1 = arith.constant 0 : i32
    return %c0_i32, %c0_i32_0 : i32, i32
  }
  func.func @transform_2(%arg0: i32) -> (i32, i32) {
    %c0_i32 = arith.constant 0 : i32
    %c0_i32_0 = arith.constant 0 : i32
    %c0_i32_1 = arith.constant 0 : i32
    return %c0_i32, %c0_i32_0 : i32, i32
  }
  func.func @transform_3(%arg0: i32) -> (i32, i32) {
    %c0_i32 = arith.constant 0 : i32
    %c0_i32_0 = arith.constant 0 : i32
    %c0_i32_1 = arith.constant 0 : i32
    return %c0_i32, %c0_i32_0 : i32, i32
  }
  func.func @transform_4(%arg0: i32) -> (i32, i32) {
    %c0_i32 = arith.constant 0 : i32
    %c0_i32_0 = arith.constant 0 : i32
    %c0_i32_1 = arith.constant 0 : i32
    return %c0_i32, %c0_i32_0 : i32, i32
  }
  func.func @transform_5(%arg0: i32) -> (i32, i32, i32) {
    %c0_i32 = arith.constant 0 : i32
    %c0_i32_0 = arith.constant 0 : i32
    %c0_i32_1 = arith.constant 0 : i32
    %c0_i32_2 = arith.constant 0 : i32
    return %c0_i32, %c0_i32_0, %c0_i32_1 : i32, i32, i32
  }
  func.func @transform_6(%arg0: i32) -> (i32, i32, i32) {
    %c0_i32 = arith.constant 0 : i32
    %c0_i32_0 = arith.constant 0 : i32
    %c0_i32_1 = arith.constant 0 : i32
    %c0_i32_2 = arith.constant 0 : i32
    return %c0_i32, %c0_i32_0, %c0_i32_1 : i32, i32, i32
  }
}

</mosaic_0001>

<llo_original>
// kernel: tpu_custom_call.1
$region0: #{tpu_custom_call.1}
  #allocation0 [shape = 'u32[]', space=smem, size = 0x4, offset = 0x4, fixed_abs, tag = 'smem constant byte address 0x4 - core index']
  #allocation1 [shape = 'u32[144,128]{1,0:T(1,128)}', space=vmem, size = 0x12000, scoped, tag = 'internal scratch']
  %s0 = inlined_call_operand.hbm [shape: f32[2,8,32], index: 0, kind: input, shape index: {}]
  %s1 = inlined_call_operand.hbm [shape: f32[32,96], index: 1, kind: input, shape index: {}]
  %s2 = inlined_call_operand.vmem [shape: f32[1,96], index: 2, kind: input, shape index: {}]
  %s3 = inlined_call_operand.hbm [shape: f32[32,32], index: 3, kind: input, shape index: {}]
  %s4 = inlined_call_operand.vmem [shape: f32[1,32], index: 4, kind: input, shape index: {}]
  %s5 = inlined_call_operand.hbm [shape: f32[2,8,32], index: 5, kind: output, shape index: {0}]
  %s6 = inlined_call_operand.hbm [shape: f32[2,8,64], index: 6, kind: output, shape index: {1}]
  %7 = xla_tuple %s5, %s6
  %s8 = sld [smem:[#allocation0]]
  $region50: #{tpu_custom_call.1} parent=0
    _
  %s10 = ssub.s32 1, %s8
  %s11 = scalar_select 0, %s10, %s8
  $region1: #{tpu_custom_call.1} parent=0
    #allocation2 [shape = 'u8[8192]{0}', space=vmem, size = 0x2000, scoped, tag = 'input window, operand 0, single buffered']
    #allocation3 [shape = 's32[1]{0}', space=sflag, size = 0x4, scoped, tag = 'scoped memory for tpu_custom_call.1']
    #allocation4 [shape = 's32[1]{0}', space=sflag, size = 0x4, scoped, tag = 'scoped memory for tpu_custom_call.1']
    #allocation5 [shape = 'u8[16384]{0}', space=vmem, size = 0x4000, scoped, tag = 'input window, operand 1, single buffered']
    #allocation6 [shape = 's32[1]{0}', space=sflag, size = 0x4, scoped, tag = 'scoped memory for tpu_custom_call.1']
    #allocation7 [shape = 'u8[16384]{0}', space=vmem, size = 0x4000, scoped, tag = 'input window, operand 3, single buffered']
    #allocation8 [shape = 'u8[8192]{0}', space=vmem, size = 0x2000, scoped, tag = 'output window, operand 0, single buffered']
    #allocation9 [shape = 'u8[8192]{0}', space=vmem, size = 0x2000, scoped, tag = 'output window, operand 1, single buffered']
    #allocation10 [shape = 's32[1]{0}', space=sflag, size = 0x4, scoped, tag = 'scoped memory for tpu_custom_call.1']
    %12 = vsyncpa [#allocation3], 0
    %13 = vsyncpa [#allocation6], 0
    %14 = vsyncpa [#allocation4], 0
    %15 = vsyncpa [#allocation10], 0
    // Predicated region
    $region2: #{tpu_custom_call.1} parent=1 // pred_check
      _
    $region3: #{tpu_custom_call.1} parent=1 // pred_check_branch
      %17 = sbr.rel (0) target = $region5
    $region4: #{tpu_custom_call.1} parent=1 // pred_region
      %s19 = ssub.s32 256, 256
      %20 = vsyncadd [#allocation3], %s19
      %s21 = sshll.u32 [#allocation2], 4
      %s22 = int_to_ptr.vmem [resolvable:$true] %s21
      %27 = dma.hbm_to_vmem [thread:$0]  %s0, 256, %s22, [#allocation3], 128, 128, 8
    $region5: #{tpu_custom_call.1} parent=1 // pred_fallthru
      _
    // Predicated region
    $region6: #{tpu_custom_call.1} parent=1 // pred_check
      _
    $region7: #{tpu_custom_call.1} parent=1 // pred_check_branch
      %29 = sbr.rel (0) target = $region9
    $region8: #{tpu_custom_call.1} parent=1 // pred_region
      %s31 = ssub.s32 512, 512
      %32 = vsyncadd [#allocation6], %s31
      %s33 = sshll.u32 [#allocation5], 4
      %s34 = int_to_ptr.vmem [resolvable:$true] %s33
      %39 = dma.hbm_to_vmem [thread:$0]  %s1, 512, %s34, [#allocation6], 128, 128, 8
    $region9: #{tpu_custom_call.1} parent=1 // pred_fallthru
      _
    // Predicated region
    $region10: #{tpu_custom_call.1} parent=1 // pred_check
      _
    $region11: #{tpu_custom_call.1} parent=1 // pred_check_branch
      %41 = sbr.rel (0) target = $region13
    $region12: #{tpu_custom_call.1} parent=1 // pred_region
      _
    $region13: #{tpu_custom_call.1} parent=1 // pred_fallthru
      _
    // Predicated region
    $region14: #{tpu_custom_call.1} parent=1 // pred_check
      _
    $region15: #{tpu_custom_call.1} parent=1 // pred_check_branch
      %43 = sbr.rel (0) target = $region17
    $region16: #{tpu_custom_call.1} parent=1 // pred_region
      %s45 = ssub.s32 512, 512
      %46 = vsyncadd [#allocation6], %s45
      %s47 = sshll.u32 [#allocation7], 4
      %s48 = int_to_ptr.vmem [resolvable:$true] %s47
      %53 = dma.hbm_to_vmem [thread:$0]  %s3, 512, %s48, [#allocation6], 128, 128, 8
    $region17: #{tpu_custom_call.1} parent=1 // pred_fallthru
      _
    // Predicated region
    $region18: #{tpu_custom_call.1} parent=1 // pred_check
      _
    $region19: #{tpu_custom_call.1} parent=1 // pred_check_branch
      %55 = sbr.rel (0) target = $region21
    $region20: #{tpu_custom_call.1} parent=1 // pred_region
      _
    $region21: #{tpu_custom_call.1} parent=1 // pred_fallthru
      _
    // Predicated region
    $region22: #{tpu_custom_call.1} parent=1 // pred_check
      _
    $region23: #{tpu_custom_call.1} parent=1 // pred_check_branch
      %57 = sbr.rel (0) target = $region25
    $region24: #{tpu_custom_call.1} parent=1 // pred_region
      %58 = dma.done [#allocation3], 256
    $region25: #{tpu_custom_call.1} parent=1 // pred_fallthru
      _
    // Predicated region
    $region26: #{tpu_custom_call.1} parent=1 // pred_check
      _
    $region27: #{tpu_custom_call.1} parent=1 // pred_check_branch
      %60 = sbr.rel (0) target = $region29
    $region28: #{tpu_custom_call.1} parent=1 // pred_region
      %61 = dma.done [#allocation6], 512
    $region29: #{tpu_custom_call.1} parent=1 // pred_fallthru
      _
    // Predicated region
    $region30: #{tpu_custom_call.1} parent=1 // pred_check
      _
    $region31: #{tpu_custom_call.1} parent=1 // pred_check_branch
      %63 = sbr.rel (0) target = $region33
    $region32: #{tpu_custom_call.1} parent=1 // pred_region
      %64 = dma.done [#allocation6], 512
    $region33: #{tpu_custom_call.1} parent=1 // pred_fallthru
      _
    %v65 = vld [vmem:[#allocation2] sm:$0xff]
    %v66 = vld [vmem:[#allocation2 + $0x8] sm:$0xff]
    %v67 = vld [vmem:[#allocation5] sm:$0xff]
    %v68 = vld [vmem:[#allocation5 + $0x8] sm:$0xff]
    %v69 = vld [vmem:[#allocation5 + $0x10] sm:$0xff]
    %v70 = vld [vmem:[#allocation5 + $0x18] sm:$0xff]
    %v71 = vld [vmem:[%s2] sm:$0x1]
    %v73 = vlaneseq
    %v74 = vshrl.u32 %v73, 7
    %v75 = vsub.s32 0, %v74
    %v76 = vrot.slane %v71, %v75
    %vm78 = vcmask 261120
    %v80 = vsel %vm78, %v65, 0
    %v83 = vsel %vm78, %v66, 0
    %85 = vmatprep.subr.mxu0 0.0
    %86 = vmatpush1.msra.mxu0 %v67
    %87 = vmatprep.subr.mxu0 0.0
    %88 = vmatpush1.msra.mxu0 %v68
    %89 = vmatprep.subr.mxu0 0.0
    %90 = vmatpush1.msra.mxu0 %v69
    %91 = vmatprep.subr.mxu0 0.0
    %92 = vmatpush1.msra.mxu0 %v70
    %93 = vmatprep.subr.mxu0 0.0
    %94 = vmatpush1.msra.mxu0 0.0
    %95 = vmatprep.subr.mxu0 0.0
    %96 = vmatpush1.msra.mxu0 0.0
    %97 = vmatprep.subr.mxu0 0.0
    %98 = vmatpush1.msra.mxu0 0.0
    %99 = vmatprep.subr.mxu0 0.0
    %100 = vmatpush1.msra.mxu0 0.0
    %101 = vmatprep.subr.mxu0 0.0
    %102 = vmatpush1.msra.mxu0 0.0
    %103 = vmatprep.subr.mxu0 0.0
    %104 = vmatpush1.msra.mxu0 0.0
    %105 = vmatprep.subr.mxu0 0.0
    %106 = vmatpush1.msra.mxu0 0.0
    %107 = vmatprep.subr.mxu0 0.0
    %108 = vmatpush1.msra.mxu0 0.0
    %109 = vmatprep.subr.mxu0 0.0
    %110 = vmatpush1.msra.mxu0 0.0
    %111 = vmatprep.subr.mxu0 0.0
    %112 = vmatpush1.msra.mxu0 0.0
    %113 = vmatprep.subr.mxu0 0.0
    %114 = vmatpush1.msra.mxu0 0.0
    %115 = vmatprep.subr.mxu0 0.0
    %116 = vmatpush1.msra.mxu0 0.0
    %117 = vmatprep.subr.mxu0 0.0
    %118 = vmatpush1.msra.mxu0 0.0
    %119 = vmatprep.subr.mxu0 0.0
    %120 = vmatpush1.msra.mxu0 0.0
    %121 = vmatprep.subr.mxu0 0.0
    %122 = vmatpush1.msra.mxu0 0.0
    %123 = vmatprep.subr.mxu0 0.0
    %124 = vmatpush1.msra.mxu0 0.0
    %125 = vmatprep.subr.mxu0 0.0
    %126 = vmatpush1.msra.mxu0 0.0
    %127 = vmatprep.subr.mxu0 0.0
    %128 = vmatpush1.msra.mxu0 0.0
    %129 = vmatprep.subr.mxu0 0.0
    %130 = vmatpush1.msra.mxu0 0.0
    %131 = vmatprep.subr.mxu0 0.0
    %132 = vmatpush1.msra.mxu0 0.0
    %133 = vmatprep.subr.mxu0 0.0
    %134 = vmatpush1.msra.mxu0 0.0
    %135 = vmatprep.subr.mxu0 0.0
    %136 = vmatpush1.msra.mxu0 0.0
    %137 = vmatprep.subr.mxu0 0.0
    %138 = vmatpush1.msra.mxu0 0.0
    %139 = vmatprep.subr.mxu0 0.0
    %140 = vmatpush1.msra.mxu0 0.0
    %141 = vmatprep.subr.mxu0 0.0
    %142 = vmatpush1.msra.mxu0 0.0
    %143 = vmatprep.subr.mxu0 0.0
    %144 = vmatpush1.msra.mxu0 0.0
    %145 = vmatprep.subr.mxu0 0.0
    %146 = vmatpush1.msra.mxu0 0.0
    %147 = vmatprep.subr.mxu0 0.0
    %148 = vmatpush1.msra.mxu0 0.0
    %149 = vmatprep.mubr.f32.mxu0 0.0
    %150 = vmatmul.mubr.f32.gmra.mrb[0].mxu0 %v80
    %v151 = vpop.f32.mrb[0].mxu0
    %v152 = vadd.f32 %v76, %v151
    %v153 = vpop.f32.mrb[0].mxu0
    %154 = vmatprep.mubr.f32.mxu0 0.0
    %155 = vmatmul.mubr.f32.gmra.mrb[0].mxu0 %v83
    %v156 = vpop.f32.mrb[0].mxu0
    %v157 = vadd.f32 %v76, %v156
    %v158 = vpop.f32.mrb[0].mxu0
    %159 = vdwg.mxu0
    %162 = vrot.lane.b32.xlu0 %v152, 96
    %v163 = vpop.permute.xlu0 %162
    %164 = vrot.lane.b32.xlu0 %v157, 96
    %v165 = vpop.permute.xlu0 %164
    %vm168 = vcmask 523264
    %169 = vst.msk [vmem:[#allocation9] sm:$0xff] %vm168, %v163
    %170 = vst.msk [vmem:[#allocation9 + $0x8] sm:$0xff] %vm168, %v165
    %171 = vrot.lane.b32.xlu0 %v152, 120
    %v172 = vpop.permute.xlu0 %171
    %173 = vrot.lane.b32.xlu0 %v157, 120
    %v174 = vpop.permute.xlu0 %173
    %177 = vrot.lane.b32.xlu0 %v152, 112
    %v178 = vpop.permute.xlu0 %177
    %179 = vrot.lane.b32.xlu0 %v157, 112
    %v180 = vpop.permute.xlu0 %179
    %183 = vrot.lane.b32.xlu0 %v152, 104
    %v184 = vpop.permute.xlu0 %183
    %185 = vrot.lane.b32.xlu0 %v157, 104
    %v186 = vpop.permute.xlu0 %185
    %189 = vrot.lane.b32.xlu0 %v152, 88
    %v190 = vpop.permute.xlu0 %189
    %191 = vrot.lane.b32.xlu0 %v157, 88
    %v192 = vpop.permute.xlu0 %191
    %195 = vrot.lane.b32.xlu0 %v152, 80
    %v196 = vpop.permute.xlu0 %195
    %197 = vrot.lane.b32.xlu0 %v157, 80
    %v198 = vpop.permute.xlu0 %197
    %201 = vrot.lane.b32.xlu0 %v152, 72
    %v202 = vpop.permute.xlu0 %201
    %203 = vrot.lane.b32.xlu0 %v157, 72
    %v204 = vpop.permute.xlu0 %203
    %207 = vrot.lane.b32.xlu0 %v152, 64
    %v208 = vpop.permute.xlu0 %207
    %209 = vrot.lane.b32.xlu0 %v157, 64
    %v210 = vpop.permute.xlu0 %209
    %213 = vrot.lane.b32.xlu0 %v152, 56
    %v214 = vpop.permute.xlu0 %213
    %215 = vrot.lane.b32.xlu0 %v157, 56
    %v216 = vpop.permute.xlu0 %215
    %219 = vrot.lane.b32.xlu0 %v152, 48
    %v220 = vpop.permute.xlu0 %219
    %221 = vrot.lane.b32.xlu0 %v157, 48
    %v222 = vpop.permute.xlu0 %221
    %225 = vrot.lane.b32.xlu0 %v152, 40
    %v226 = vpop.permute.xlu0 %225
    %227 = vrot.lane.b32.xlu0 %v157, 40
    %v228 = vpop.permute.xlu0 %227
    %v231 = vcombine.low %v152, %v178
    %v232 = vcombine.high %v152, %v178
    %v234 = vunpack.c.l.s4 1983009808
    %v235 = vunpack.c.0.s8 %v234
    %v236 = vlaneseq
    %v237 = vshrl.u32 %v236, 7
    %v238 = vsub.s32 %v235, %v237
    %v239 = vrot.slane %v231, %v238
    %v241 = vunpack.c.l.s4 1983009808
    %v242 = vunpack.c.0.s8 %v241
    %v243 = vlaneseq
    %v244 = vshrl.u32 %v243, 7
    %v245 = vsub.s32 %v242, %v244
    %v246 = vrot.slane %v232, %v245
    %v247 = vcombine.low %v172, %v184
    %v248 = vcombine.high %v172, %v184
    %v250 = vunpack.c.l.s4 1983009808
    %v251 = vunpack.c.0.s8 %v250
    %v252 = vlaneseq
    %v253 = vshrl.u32 %v252, 7
    %v254 = vsub.s32 %v251, %v253
    %v255 = vrot.slane %v247, %v254
    %v257 = vunpack.c.l.s4 1983009808
    %v258 = vunpack.c.0.s8 %v257
    %v259 = vlaneseq
    %v260 = vshrl.u32 %v259, 7
    %v261 = vsub.s32 %v258, %v260
    %v262 = vrot.slane %v248, %v261
    %v263 = vcombine.low %v163, %v196
    %v264 = vcombine.high %v163, %v196
    %v266 = vunpack.c.l.s4 1983009808
    %v267 = vunpack.c.0.s8 %v266
    %v268 = vlaneseq
    %v269 = vshrl.u32 %v268, 7
    %v270 = vsub.s32 %v267, %v269
    %v271 = vrot.slane %v263, %v270
    %v273 = vunpack.c.l.s4 1983009808
    %v274 = vunpack.c.0.s8 %v273
    %v275 = vlaneseq
    %v276 = vshrl.u32 %v275, 7
    %v277 = vsub.s32 %v274, %v276
    %v278 = vrot.slane %v264, %v277
    %v279 = vcombine.low %v190, %v202
    %v280 = vcombine.high %v190, %v202
    %v282 = vunpack.c.l.s4 1983009808
    %v283 = vunpack.c.0.s8 %v282
    %v284 = vlaneseq
    %v285 = vshrl.u32 %v284, 7
    %v286 = vsub.s32 %v283, %v285
    %v287 = vrot.slane %v279, %v286
    %v289 = vunpack.c.l.s4 1983009808
    %v290 = vunpack.c.0.s8 %v289
    %v291 = vlaneseq
    %v292 = vshrl.u32 %v291, 7
    %v293 = vsub.s32 %v290, %v292
    %v294 = vrot.slane %v280, %v293
    %v295 = vcombine.low %v239, %v255
    %v296 = vcombine.high %v239, %v255
    %v298 = vunpack.c.l.s4 1934713408
    %v299 = vunpack.c.0.s8 %v298
    %v300 = vlaneseq
    %v301 = vshrl.u32 %v300, 7
    %v302 = vsub.s32 %v299, %v301
    %v303 = vrot.slane %v295, %v302
    %v305 = vunpack.c.l.s4 1934713408
    %v306 = vunpack.c.0.s8 %v305
    %v307 = vlaneseq
    %v308 = vshrl.u32 %v307, 7
    %v309 = vsub.s32 %v306, %v308
    %v310 = vrot.slane %v296, %v309
    %v311 = vcombine.low %v246, %v262
    %v312 = vcombine.high %v246, %v262
    %v314 = vunpack.c.l.s4 1934713408
    %v315 = vunpack.c.0.s8 %v314
    %v316 = vlaneseq
    %v317 = vshrl.u32 %v316, 7
    %v318 = vsub.s32 %v315, %v317
    %v319 = vrot.slane %v311, %v318
    %v321 = vunpack.c.l.s4 1934713408
    %v322 = vunpack.c.0.s8 %v321
    %v323 = vlaneseq
    %v324 = vshrl.u32 %v323, 7
    %v325 = vsub.s32 %v322, %v324
    %v326 = vrot.slane %v312, %v325
    %v327 = vcombine.low %v271, %v287
    %v328 = vcombine.high %v271, %v287
    %v330 = vunpack.c.l.s4 1934713408
    %v331 = vunpack.c.0.s8 %v330
    %v332 = vlaneseq
    %v333 = vshrl.u32 %v332, 7
    %v334 = vsub.s32 %v331, %v333
    %v335 = vrot.slane %v327, %v334
    %v337 = vunpack.c.l.s4 1934713408
    %v338 = vunpack.c.0.s8 %v337
    %v339 = vlaneseq
    %v340 = vshrl.u32 %v339, 7
    %v341 = vsub.s32 %v338, %v340
    %v342 = vrot.slane %v328, %v341
    %v343 = vcombine.low %v278, %v294
    %v344 = vcombine.high %v278, %v294
    %v346 = vunpack.c.l.s4 1934713408
    %v347 = vunpack.c.0.s8 %v346
    %v348 = vlaneseq
    %v349 = vshrl.u32 %v348, 7
    %v350 = vsub.s32 %v347, %v349
    %v351 = vrot.slane %v343, %v350
    %v353 = vunpack.c.l.s4 1934713408
    %v354 = vunpack.c.0.s8 %v353
    %v355 = vlaneseq
    %v356 = vshrl.u32 %v355, 7
    %v357 = vsub.s32 %v354, %v356
    %v358 = vrot.slane %v344, %v357
    %v359 = vcombine.low %v303, %v335
    %v360 = vcombine.high %v303, %v335
    %v361 = vcombine.low %v310, %v342
    %v362 = vcombine.high %v310, %v342
    %v363 = vcombine.low %v319, %v351
    %v364 = vcombine.high %v319, %v351
    %v365 = vcombine.low %v326, %v358
    %v366 = vcombine.high %v326, %v358
    %v367 = vcombine.low %v208, %v220
    %v368 = vcombine.high %v208, %v220
    %v370 = vunpack.c.l.s4 1983009808
    %v371 = vunpack.c.0.s8 %v370
    %v372 = vlaneseq
    %v373 = vshrl.u32 %v372, 7
    %v374 = vsub.s32 %v371, %v373
    %v375 = vrot.slane %v367, %v374
    %v377 = vunpack.c.l.s4 1983009808
    %v378 = vunpack.c.0.s8 %v377
    %v379 = vlaneseq
    %v380 = vshrl.u32 %v379, 7
    %v381 = vsub.s32 %v378, %v380
    %v382 = vrot.slane %v368, %v381
    %v383 = vcombine.low %v214, %v226
    %v384 = vcombine.high %v214, %v226
    %v386 = vunpack.c.l.s4 1983009808
    %v387 = vunpack.c.0.s8 %v386
    %v388 = vlaneseq
    %v389 = vshrl.u32 %v388, 7
    %v390 = vsub.s32 %v387, %v389
    %v391 = vrot.slane %v383, %v390
    %v393 = vunpack.c.l.s4 1983009808
    %v394 = vunpack.c.0.s8 %v393
    %v395 = vlaneseq
    %v396 = vshrl.u32 %v395, 7
    %v397 = vsub.s32 %v394, %v396
    %v398 = vrot.slane %v384, %v397
    %v399 = vcombine.low %v375, %v391
    %v400 = vcombine.high %v375, %v391
    %v402 = vunpack.c.l.s4 1934713408
    %v403 = vunpack.c.0.s8 %v402
    %v404 = vlaneseq
    %v405 = vshrl.u32 %v404, 7
    %v406 = vsub.s32 %v403, %v405
    %v407 = vrot.slane %v399, %v406
    %v409 = vunpack.c.l.s4 1934713408
    %v410 = vunpack.c.0.s8 %v409
    %v411 = vlaneseq
    %v412 = vshrl.u32 %v411, 7
    %v413 = vsub.s32 %v410, %v412
    %v414 = vrot.slane %v400, %v413
    %v415 = vcombine.low %v382, %v398
    %v416 = vcombine.high %v382, %v398
    %v418 = vunpack.c.l.s4 1934713408
    %v419 = vunpack.c.0.s8 %v418
    %v420 = vlaneseq
    %v421 = vshrl.u32 %v420, 7
    %v422 = vsub.s32 %v419, %v421
    %v423 = vrot.slane %v415, %v422
    %v425 = vunpack.c.l.s4 1934713408
    %v426 = vunpack.c.0.s8 %v425
    %v427 = vlaneseq
    %v428 = vshrl.u32 %v427, 7
    %v429 = vsub.s32 %v426, %v428
    %v430 = vrot.slane %v416, %v429
    %v431 = vcombine.high %v407, 0.0
    %v432 = vcombine.high %v414, 0.0
    %v433 = vcombine.high %v423, 0.0
    %v434 = vcombine.high %v430, 0.0
    %v435 = vcombine.low %v157, %v180
    %v436 = vcombine.high %v157, %v180
    %v438 = vunpack.c.l.s4 1983009808
    %v439 = vunpack.c.0.s8 %v438
    %v440 = vlaneseq
    %v441 = vshrl.u32 %v440, 7
    %v442 = vsub.s32 %v439, %v441
    %v443 = vrot.slane %v435, %v442
    %v445 = vunpack.c.l.s4 1983009808
    %v446 = vunpack.c.0.s8 %v445
    %v447 = vlaneseq
    %v448 = vshrl.u32 %v447, 7
    %v449 = vsub.s32 %v446, %v448
    %v450 = vrot.slane %v436, %v449
    %v451 = vcombine.low %v174, %v186
    %v452 = vcombine.high %v174, %v186
    %v454 = vunpack.c.l.s4 1983009808
    %v455 = vunpack.c.0.s8 %v454
    %v456 = vlaneseq
    %v457 = vshrl.u32 %v456, 7
    %v458 = vsub.s32 %v455, %v457
    %v459 = vrot.slane %v451, %v458
    %v461 = vunpack.c.l.s4 1983009808
    %v462 = vunpack.c.0.s8 %v461
    %v463 = vlaneseq
    %v464 = vshrl.u32 %v463, 7
    %v465 = vsub.s32 %v462, %v464
    %v466 = vrot.slane %v452, %v465
    %v467 = vcombine.low %v165, %v198
    %v468 = vcombine.high %v165, %v198
    %v470 = vunpack.c.l.s4 1983009808
    %v471 = vunpack.c.0.s8 %v470
    %v472 = vlaneseq
    %v473 = vshrl.u32 %v472, 7
    %v474 = vsub.s32 %v471, %v473
    %v475 = vrot.slane %v467, %v474
    %v477 = vunpack.c.l.s4 1983009808
    %v478 = vunpack.c.0.s8 %v477
    %v479 = vlaneseq
    %v480 = vshrl.u32 %v479, 7
    %v481 = vsub.s32 %v478, %v480
    %v482 = vrot.slane %v468, %v481
    %v483 = vcombine.low %v192, %v204
    %v484 = vcombine.high %v192, %v204
    %v486 = vunpack.c.l.s4 1983009808
    %v487 = vunpack.c.0.s8 %v486
    %v488 = vlaneseq
    %v489 = vshrl.u32 %v488, 7
    %v490 = vsub.s32 %v487, %v489
    %v491 = vrot.slane %v483, %v490
    %v493 = vunpack.c.l.s4 1983009808
    %v494 = vunpack.c.0.s8 %v493
    %v495 = vlaneseq
    %v496 = vshrl.u32 %v495, 7
    %v497 = vsub.s32 %v494, %v496
    %v498 = vrot.slane %v484, %v497
    %v499 = vcombine.low %v443, %v459
    %v500 = vcombine.high %v443, %v459
    %v502 = vunpack.c.l.s4 1934713408
    %v503 = vunpack.c.0.s8 %v502
    %v504 = vlaneseq
    %v505 = vshrl.u32 %v504, 7
    %v506 = vsub.s32 %v503, %v505
    %v507 = vrot.slane %v499, %v506
    %v509 = vunpack.c.l.s4 1934713408
    %v510 = vunpack.c.0.s8 %v509
    %v511 = vlaneseq
    %v512 = vshrl.u32 %v511, 7
    %v513 = vsub.s32 %v510, %v512
    %v514 = vrot.slane %v500, %v513
    %v515 = vcombine.low %v450, %v466
    %v516 = vcombine.high %v450, %v466
    %v518 = vunpack.c.l.s4 1934713408
    %v519 = vunpack.c.0.s8 %v518
    %v520 = vlaneseq
    %v521 = vshrl.u32 %v520, 7
    %v522 = vsub.s32 %v519, %v521
    %v523 = vrot.slane %v515, %v522
    %v525 = vunpack.c.l.s4 1934713408
    %v526 = vunpack.c.0.s8 %v525
    %v527 = vlaneseq
    %v528 = vshrl.u32 %v527, 7
    %v529 = vsub.s32 %v526, %v528
    %v530 = vrot.slane %v516, %v529
    %v531 = vcombine.low %v475, %v491
    %v532 = vcombine.high %v475, %v491
    %v534 = vunpack.c.l.s4 1934713408
    %v535 = vunpack.c.0.s8 %v534
    %v536 = vlaneseq
    %v537 = vshrl.u32 %v536, 7
    %v538 = vsub.s32 %v535, %v537
    %v539 = vrot.slane %v531, %v538
    %v541 = vunpack.c.l.s4 1934713408
    %v542 = vunpack.c.0.s8 %v541
    %v543 = vlaneseq
    %v544 = vshrl.u32 %v543, 7
    %v545 = vsub.s32 %v542, %v544
    %v546 = vrot.slane %v532, %v545
    %v547 = vcombine.low %v482, %v498
    %v548 = vcombine.high %v482, %v498
    %v550 = vunpack.c.l.s4 1934713408
    %v551 = vunpack.c.0.s8 %v550
    %v552 = vlaneseq
    %v553 = vshrl.u32 %v552, 7
    %v554 = vsub.s32 %v551, %v553
    %v555 = vrot.slane %v547, %v554
    %v557 = vunpack.c.l.s4 1934713408
    %v558 = vunpack.c.0.s8 %v557
    %v559 = vlaneseq
    %v560 = vshrl.u32 %v559, 7
    %v561 = vsub.s32 %v558, %v560
    %v562 = vrot.slane %v548, %v561
    %v563 = vcombine.low %v507, %v539
    %v564 = vcombine.high %v507, %v539
    %v565 = vcombine.low %v514, %v546
    %v566 = vcombine.high %v514, %v546
    %v567 = vcombine.low %v523, %v555
    %v568 = vcombine.high %v523, %v555
    %v569 = vcombine.low %v530, %v562
    %v570 = vcombine.high %v530, %v562
    %v571 = vcombine.low %v210, %v222
    %v572 = vcombine.high %v210, %v222
    %v574 = vunpack.c.l.s4 1983009808
    %v575 = vunpack.c.0.s8 %v574
    %v576 = vlaneseq
    %v577 = vshrl.u32 %v576, 7
    %v578 = vsub.s32 %v575, %v577
    %v579 = vrot.slane %v571, %v578
    %v581 = vunpack.c.l.s4 1983009808
    %v582 = vunpack.c.0.s8 %v581
    %v583 = vlaneseq
    %v584 = vshrl.u32 %v583, 7
    %v585 = vsub.s32 %v582, %v584
    %v586 = vrot.slane %v572, %v585
    %v587 = vcombine.low %v216, %v228
    %v588 = vcombine.high %v216, %v228
    %v590 = vunpack.c.l.s4 1983009808
    %v591 = vunpack.c.0.s8 %v590
    %v592 = vlaneseq
    %v593 = vshrl.u32 %v592, 7
    %v594 = vsub.s32 %v591, %v593
    %v595 = vrot.slane %v587, %v594
    %v597 = vunpack.c.l.s4 1983009808
    %v598 = vunpack.c.0.s8 %v597
    %v599 = vlaneseq
    %v600 = vshrl.u32 %v599, 7
    %v601 = vsub.s32 %v598, %v600
    %v602 = vrot.slane %v588, %v601
    %v603 = vcombine.low %v579, %v595
    %v604 = vcombine.high %v579, %v595
    %v606 = vunpack.c.l.s4 1934713408
    %v607 = vunpack.c.0.s8 %v606
    %v608 = vlaneseq
    %v609 = vshrl.u32 %v608, 7
    %v610 = vsub.s32 %v607, %v609
    %v611 = vrot.slane %v603, %v610
    %v613 = vunpack.c.l.s4 1934713408
    %v614 = vunpack.c.0.s8 %v613
    %v615 = vlaneseq
    %v616 = vshrl.u32 %v615, 7
    %v617 = vsub.s32 %v614, %v616
    %v618 = vrot.slane %v604, %v617
    %v619 = vcombine.low %v586, %v602
    %v620 = vcombine.high %v586, %v602
    %v622 = vunpack.c.l.s4 1934713408
    %v623 = vunpack.c.0.s8 %v622
    %v624 = vlaneseq
    %v625 = vshrl.u32 %v624, 7
    %v626 = vsub.s32 %v623, %v625
    %v627 = vrot.slane %v619, %v626
    %v629 = vunpack.c.l.s4 1934713408
    %v630 = vunpack.c.0.s8 %v629
    %v631 = vlaneseq
    %v632 = vshrl.u32 %v631, 7
    %v633 = vsub.s32 %v630, %v632
    %v634 = vrot.slane %v620, %v633
    %v635 = vcombine.high %v611, 0.0
    %v636 = vcombine.high %v618, 0.0
    %v637 = vcombine.high %v627, 0.0
    %v638 = vcombine.high %v634, 0.0
    %v639 = vcombine.low %v359, %v361
    %v640 = vcombine.high %v359, %v361
    %v642 = vunpack.c.l.s4 1983009808
    %v643 = vunpack.c.0.s8 %v642
    %v644 = vlaneseq
    %v645 = vshrl.u32 %v644, 7
    %v646 = vsub.s32 %v643, %v645
    %v647 = vrot.slane %v639, %v646
    %v649 = vunpack.c.l.s4 1983009808
    %v650 = vunpack.c.0.s8 %v649
    %v651 = vlaneseq
    %v652 = vshrl.u32 %v651, 7
    %v653 = vsub.s32 %v650, %v652
    %v654 = vrot.slane %v640, %v653
    %v655 = vcombine.low %v360, %v362
    %v656 = vcombine.high %v360, %v362
    %v658 = vunpack.c.l.s4 1983009808
    %v659 = vunpack.c.0.s8 %v658
    %v660 = vlaneseq
    %v661 = vshrl.u32 %v660, 7
    %v662 = vsub.s32 %v659, %v661
    %v663 = vrot.slane %v655, %v662
    %v665 = vunpack.c.l.s4 1983009808
    %v666 = vunpack.c.0.s8 %v665
    %v667 = vlaneseq
    %v668 = vshrl.u32 %v667, 7
    %v669 = vsub.s32 %v666, %v668
    %v670 = vrot.slane %v656, %v669
    %v671 = vcombine.low %v363, %v365
    %v672 = vcombine.high %v363, %v365
    %v674 = vunpack.c.l.s4 1983009808
    %v675 = vunpack.c.0.s8 %v674
    %v676 = vlaneseq
    %v677 = vshrl.u32 %v676, 7
    %v678 = vsub.s32 %v675, %v677
    %v679 = vrot.slane %v671, %v678
    %v681 = vunpack.c.l.s4 1983009808
    %v682 = vunpack.c.0.s8 %v681
    %v683 = vlaneseq
    %v684 = vshrl.u32 %v683, 7
    %v685 = vsub.s32 %v682, %v684
    %v686 = vrot.slane %v672, %v685
    %v687 = vcombine.low %v364, %v366
    %v688 = vcombine.high %v364, %v366
    %v690 = vunpack.c.l.s4 1983009808
    %v691 = vunpack.c.0.s8 %v690
    %v692 = vlaneseq
    %v693 = vshrl.u32 %v692, 7
    %v694 = vsub.s32 %v691, %v693
    %v695 = vrot.slane %v687, %v694
    %v697 = vunpack.c.l.s4 1983009808
    %v698 = vunpack.c.0.s8 %v697
    %v699 = vlaneseq
    %v700 = vshrl.u32 %v699, 7
    %v701 = vsub.s32 %v698, %v700
    %v702 = vrot.slane %v688, %v701
    %v703 = vcombine.low %v647, %v663
    %v704 = vcombine.high %v647, %v663
    %v706 = vunpack.c.l.s4 1934713408
    %v707 = vunpack.c.0.s8 %v706
    %v708 = vlaneseq
    %v709 = vshrl.u32 %v708, 7
    %v710 = vsub.s32 %v707, %v709
    %v711 = vrot.slane %v703, %v710
    %v713 = vunpack.c.l.s4 1934713408
    %v714 = vunpack.c.0.s8 %v713
    %v715 = vlaneseq
    %v716 = vshrl.u32 %v715, 7
    %v717 = vsub.s32 %v714, %v716
    %v718 = vrot.slane %v704, %v717
    %v719 = vcombine.low %v654, %v670
    %v720 = vcombine.high %v654, %v670
    %v722 = vunpack.c.l.s4 1934713408
    %v723 = vunpack.c.0.s8 %v722
    %v724 = vlaneseq
    %v725 = vshrl.u32 %v724, 7
    %v726 = vsub.s32 %v723, %v725
    %v727 = vrot.slane %v719, %v726
    %v729 = vunpack.c.l.s4 1934713408
    %v730 = vunpack.c.0.s8 %v729
    %v731 = vlaneseq
    %v732 = vshrl.u32 %v731, 7
    %v733 = vsub.s32 %v730, %v732
    %v734 = vrot.slane %v720, %v733
    %v735 = vcombine.low %v679, %v695
    %v736 = vcombine.high %v679, %v695
    %v738 = vunpack.c.l.s4 1934713408
    %v739 = vunpack.c.0.s8 %v738
    %v740 = vlaneseq
    %v741 = vshrl.u32 %v740, 7
    %v742 = vsub.s32 %v739, %v741
    %v743 = vrot.slane %v735, %v742
    %v745 = vunpack.c.l.s4 1934713408
    %v746 = vunpack.c.0.s8 %v745
    %v747 = vlaneseq
    %v748 = vshrl.u32 %v747, 7
    %v749 = vsub.s32 %v746, %v748
    %v750 = vrot.slane %v736, %v749
    %v751 = vcombine.low %v686, %v702
    %v752 = vcombine.high %v686, %v702
    %v754 = vunpack.c.l.s4 1934713408
    %v755 = vunpack.c.0.s8 %v754
    %v756 = vlaneseq
    %v757 = vshrl.u32 %v756, 7
    %v758 = vsub.s32 %v755, %v757
    %v759 = vrot.slane %v751, %v758
    %v761 = vunpack.c.l.s4 1934713408
    %v762 = vunpack.c.0.s8 %v761
    %v763 = vlaneseq
    %v764 = vshrl.u32 %v763, 7
    %v765 = vsub.s32 %v762, %v764
    %v766 = vrot.slane %v752, %v765
    %v767 = vcombine.low %v711, %v743
    %v768 = vcombine.high %v711, %v743
    %v769 = vcombine.low %v718, %v750
    %v770 = vcombine.high %v718, %v750
    %v771 = vcombine.low %v727, %v759
    %v772 = vcombine.high %v727, %v759
    %v773 = vcombine.low %v734, %v766
    %v774 = vcombine.high %v734, %v766
    %v775 = vcombine.low %v407, %v414
    %v777 = vunpack.c.l.s4 1983009808
    %v778 = vunpack.c.0.s8 %v777
    %v779 = vlaneseq
    %v780 = vshrl.u32 %v779, 7
    %v781 = vsub.s32 %v778, %v780
    %v782 = vrot.slane %v775, %v781
    %v783 = vcombine.low %v431, %v432
    %v785 = vunpack.c.l.s4 1983009808
    %v786 = vunpack.c.0.s8 %v785
    %v787 = vlaneseq
    %v788 = vshrl.u32 %v787, 7
    %v789 = vsub.s32 %v786, %v788
    %v790 = vrot.slane %v783, %v789
    %v791 = vcombine.low %v423, %v430
    %v793 = vunpack.c.l.s4 1983009808
    %v794 = vunpack.c.0.s8 %v793
    %v795 = vlaneseq
    %v796 = vshrl.u32 %v795, 7
    %v797 = vsub.s32 %v794, %v796
    %v798 = vrot.slane %v791, %v797
    %v799 = vcombine.low %v433, %v434
    %v801 = vunpack.c.l.s4 1983009808
    %v802 = vunpack.c.0.s8 %v801
    %v803 = vlaneseq
    %v804 = vshrl.u32 %v803, 7
    %v805 = vsub.s32 %v802, %v804
    %v806 = vrot.slane %v799, %v805
    %v807 = vcombine.low %v782, %v790
    %v808 = vcombine.high %v782, %v790
    %v810 = vunpack.c.l.s4 1934713408
    %v811 = vunpack.c.0.s8 %v810
    %v812 = vlaneseq
    %v813 = vshrl.u32 %v812, 7
    %v814 = vsub.s32 %v811, %v813
    %v815 = vrot.slane %v807, %v814
    %v817 = vunpack.c.l.s4 1934713408
    %v818 = vunpack.c.0.s8 %v817
    %v819 = vlaneseq
    %v820 = vshrl.u32 %v819, 7
    %v821 = vsub.s32 %v818, %v820
    %v822 = vrot.slane %v808, %v821
    %v823 = vcombine.low %v798, %v806
    %v824 = vcombine.high %v798, %v806
    %v826 = vunpack.c.l.s4 1934713408
    %v827 = vunpack.c.0.s8 %v826
    %v828 = vlaneseq
    %v829 = vshrl.u32 %v828, 7
    %v830 = vsub.s32 %v827, %v829
    %v831 = vrot.slane %v823, %v830
    %v833 = vunpack.c.l.s4 1934713408
    %v834 = vunpack.c.0.s8 %v833
    %v835 = vlaneseq
    %v836 = vshrl.u32 %v835, 7
    %v837 = vsub.s32 %v834, %v836
    %v838 = vrot.slane %v824, %v837
    %v839 = vcombine.low %v815, %v831
    %v840 = vcombine.high %v815, %v831
    %v841 = vcombine.low %v822, %v838
    %v842 = vcombine.high %v822, %v838
    %v843 = vcombine.low %v563, %v565
    %v844 = vcombine.high %v563, %v565
    %v846 = vunpack.c.l.s4 1983009808
    %v847 = vunpack.c.0.s8 %v846
    %v848 = vlaneseq
    %v849 = vshrl.u32 %v848, 7
    %v850 = vsub.s32 %v847, %v849
    %v851 = vrot.slane %v843, %v850
    %v853 = vunpack.c.l.s4 1983009808
    %v854 = vunpack.c.0.s8 %v853
    %v855 = vlaneseq
    %v856 = vshrl.u32 %v855, 7
    %v857 = vsub.s32 %v854, %v856
    %v858 = vrot.slane %v844, %v857
    %v859 = vcombine.low %v564, %v566
    %v860 = vcombine.high %v564, %v566
    %v862 = vunpack.c.l.s4 1983009808
    %v863 = vunpack.c.0.s8 %v862
    %v864 = vlaneseq
    %v865 = vshrl.u32 %v864, 7
    %v866 = vsub.s32 %v863, %v865
    %v867 = vrot.slane %v859, %v866
    %v869 = vunpack.c.l.s4 1983009808
    %v870 = vunpack.c.0.s8 %v869
    %v871 = vlaneseq
    %v872 = vshrl.u32 %v871, 7
    %v873 = vsub.s32 %v870, %v872
    %v874 = vrot.slane %v860, %v873
    %v875 = vcombine.low %v567, %v569
    %v876 = vcombine.high %v567, %v569
    %v878 = vunpack.c.l.s4 1983009808
    %v879 = vunpack.c.0.s8 %v878
    %v880 = vlaneseq
    %v881 = vshrl.u32 %v880, 7
    %v882 = vsub.s32 %v879, %v881
    %v883 = vrot.slane %v875, %v882
    %v885 = vunpack.c.l.s4 1983009808
    %v886 = vunpack.c.0.s8 %v885
    %v887 = vlaneseq
    %v888 = vshrl.u32 %v887, 7
    %v889 = vsub.s32 %v886, %v888
    %v890 = vrot.slane %v876, %v889
    %v891 = vcombine.low %v568, %v570
    %v892 = vcombine.high %v568, %v570
    %v894 = vunpack.c.l.s4 1983009808
    %v895 = vunpack.c.0.s8 %v894
    %v896 = vlaneseq
    %v897 = vshrl.u32 %v896, 7
    %v898 = vsub.s32 %v895, %v897
    %v899 = vrot.slane %v891, %v898
    %v901 = vunpack.c.l.s4 1983009808
    %v902 = vunpack.c.0.s8 %v901
    %v903 = vlaneseq
    %v904 = vshrl.u32 %v903, 7
    %v905 = vsub.s32 %v902, %v904
    %v906 = vrot.slane %v892, %v905
    %v907 = vcombine.low %v851, %v867
    %v908 = vcombine.high %v851, %v867
    %v910 = vunpack.c.l.s4 1934713408
    %v911 = vunpack.c.0.s8 %v910
    %v912 = vlaneseq
    %v913 = vshrl.u32 %v912, 7
    %v914 = vsub.s32 %v911, %v913
    %v915 = vrot.slane %v907, %v914
    %v917 = vunpack.c.l.s4 1934713408
    %v918 = vunpack.c.0.s8 %v917
    %v919 = vlaneseq
    %v920 = vshrl.u32 %v919, 7
    %v921 = vsub.s32 %v918, %v920
    %v922 = vrot.slane %v908, %v921
    %v923 = vcombine.low %v858, %v874
    %v924 = vcombine.high %v858, %v874
    %v926 = vunpack.c.l.s4 1934713408
    %v927 = vunpack.c.0.s8 %v926
    %v928 = vlaneseq
    %v929 = vshrl.u32 %v928, 7
    %v930 = vsub.s32 %v927, %v929
    %v931 = vrot.slane %v923, %v930
    %v933 = vunpack.c.l.s4 1934713408
    %v934 = vunpack.c.0.s8 %v933
    %v935 = vlaneseq
    %v936 = vshrl.u32 %v935, 7
    %v937 = vsub.s32 %v934, %v936
    %v938 = vrot.slane %v924, %v937
    %v939 = vcombine.low %v883, %v899
    %v940 = vcombine.high %v883, %v899
    %v942 = vunpack.c.l.s4 1934713408
    %v943 = vunpack.c.0.s8 %v942
    %v944 = vlaneseq
    %v945 = vshrl.u32 %v944, 7
    %v946 = vsub.s32 %v943, %v945
    %v947 = vrot.slane %v939, %v946
    %v949 = vunpack.c.l.s4 1934713408
    %v950 = vunpack.c.0.s8 %v949
    %v951 = vlaneseq
    %v952 = vshrl.u32 %v951, 7
    %v953 = vsub.s32 %v950, %v952
    %v954 = vrot.slane %v940, %v953
    %v955 = vcombine.low %v890, %v906
    %v956 = vcombine.high %v890, %v906
    %v958 = vunpack.c.l.s4 1934713408
    %v959 = vunpack.c.0.s8 %v958
    %v960 = vlaneseq
    %v961 = vshrl.u32 %v960, 7
    %v962 = vsub.s32 %v959, %v961
    %v963 = vrot.slane %v955, %v962
    %v965 = vunpack.c.l.s4 1934713408
    %v966 = vunpack.c.0.s8 %v965
    %v967 = vlaneseq
    %v968 = vshrl.u32 %v967, 7
    %v969 = vsub.s32 %v966, %v968
    %v970 = vrot.slane %v956, %v969
    %v971 = vcombine.low %v915, %v947
    %v972 = vcombine.high %v915, %v947
    %v973 = vcombine.low %v922, %v954
    %v974 = vcombine.high %v922, %v954
    %v975 = vcombine.low %v931, %v963
    %v976 = vcombine.high %v931, %v963
    %v977 = vcombine.low %v938, %v970
    %v978 = vcombine.high %v938, %v970
    %v979 = vcombine.low %v611, %v618
    %v981 = vunpack.c.l.s4 1983009808
    %v982 = vunpack.c.0.s8 %v981
    %v983 = vlaneseq
    %v984 = vshrl.u32 %v983, 7
    %v985 = vsub.s32 %v982, %v984
    %v986 = vrot.slane %v979, %v985
    %v987 = vcombine.low %v635, %v636
    %v989 = vunpack.c.l.s4 1983009808
    %v990 = vunpack.c.0.s8 %v989
    %v991 = vlaneseq
    %v992 = vshrl.u32 %v991, 7
    %v993 = vsub.s32 %v990, %v992
    %v994 = vrot.slane %v987, %v993
    %v995 = vcombine.low %v627, %v634
    %v997 = vunpack.c.l.s4 1983009808
    %v998 = vunpack.c.0.s8 %v997
    %v999 = vlaneseq
    %v1000 = vshrl.u32 %v999, 7
    %v1001 = vsub.s32 %v998, %v1000
    %v1002 = vrot.slane %v995, %v1001
    %v1003 = vcombine.low %v637, %v638
    %v1005 = vunpack.c.l.s4 1983009808
    %v1006 = vunpack.c.0.s8 %v1005
    %v1007 = vlaneseq
    %v1008 = vshrl.u32 %v1007, 7
    %v1009 = vsub.s32 %v1006, %v1008
    %v1010 = vrot.slane %v1003, %v1009
    %v1011 = vcombine.low %v986, %v994
    %v1012 = vcombine.high %v986, %v994
    %v1014 = vunpack.c.l.s4 1934713408
    %v1015 = vunpack.c.0.s8 %v1014
    %v1016 = vlaneseq
    %v1017 = vshrl.u32 %v1016, 7
    %v1018 = vsub.s32 %v1015, %v1017
    %v1019 = vrot.slane %v1011, %v1018
    %v1021 = vunpack.c.l.s4 1934713408
    %v1022 = vunpack.c.0.s8 %v1021
    %v1023 = vlaneseq
    %v1024 = vshrl.u32 %v1023, 7
    %v1025 = vsub.s32 %v1022, %v1024
    %v1026 = vrot.slane %v1012, %v1025
    %v1027 = vcombine.low %v1002, %v1010
    %v1028 = vcombine.high %v1002, %v1010
    %v1030 = vunpack.c.l.s4 1934713408
    %v1031 = vunpack.c.0.s8 %v1030
    %v1032 = vlaneseq
    %v1033 = vshrl.u32 %v1032, 7
    %v1034 = vsub.s32 %v1031, %v1033
    %v1035 = vrot.slane %v1027, %v1034
    %v1037 = vunpack.c.l.s4 1934713408
    %v1038 = vunpack.c.0.s8 %v1037
    %v1039 = vlaneseq
    %v1040 = vshrl.u32 %v1039, 7
    %v1041 = vsub.s32 %v1038, %v1040
    %v1042 = vrot.slane %v1028, %v1041
    %v1043 = vcombine.low %v1019, %v1035
    %v1044 = vcombine.high %v1019, %v1035
    %v1045 = vcombine.low %v1026, %v1042
    %v1046 = vcombine.high %v1026, %v1042
    %v1047 = vlaneseq
    %v1048 = vshrl.u32 %v1047, 7
    %v1049 = vlaneseq
    %v1050 = vand.u32 %v1049, 127
    %vm1051 = vcmp.ge.s32.totalorder %v1048, %v1050
    %v1052 = vsel %vm1051, 0.0, -1e+30
    %vm1053 = vcmask 64512
    %v1055 = vsel %vm1053, %v767, 0
    %v1058 = vsel %vm1053, %v771, 0
    %1060 = vmatprep.subr.mxu0 0.0
    %1061 = vmatpush1.xpose.msra.mxu0 %v1058
    %1062 = vmatprep.subr.mxu0 0.0
    %1063 = vmatpush1.xpose.msra.mxu0 0.0
    %1064 = vmatprep.subr.mxu0 0.0
    %1065 = vmatpush1.xpose.msra.mxu0 0.0
    %1066 = vmatprep.subr.mxu0 0.0
    %1067 = vmatpush1.xpose.msra.mxu0 0.0
    %1068 = vmatprep.subr.mxu0 0.0
    %1069 = vmatpush1.xpose.msra.mxu0 0.0
    %1070 = vmatprep.subr.mxu0 0.0
    %1071 = vmatpush1.xpose.msra.mxu0 0.0
    %1072 = vmatprep.subr.mxu0 0.0
    %1073 = vmatpush1.xpose.msra.mxu0 0.0
    %1074 = vmatprep.subr.mxu0 0.0
    %1075 = vmatpush1.xpose.msra.mxu0 0.0
    %1076 = vmatprep.subr.mxu0 0.0
    %1077 = vmatpush1.xpose.msra.mxu0 0.0
    %1078 = vmatprep.subr.mxu0 0.0
    %1079 = vmatpush1.xpose.msra.mxu0 0.0
    %1080 = vmatprep.subr.mxu0 0.0
    %1081 = vmatpush1.xpose.msra.mxu0 0.0
    %1082 = vmatprep.subr.mxu0 0.0
    %1083 = vmatpush1.xpose.msra.mxu0 0.0
    %1084 = vmatprep.subr.mxu0 0.0
    %1085 = vmatpush1.xpose.msra.mxu0 0.0
    %1086 = vmatprep.subr.mxu0 0.0
    %1087 = vmatpush1.xpose.msra.mxu0 0.0
    %1088 = vmatprep.subr.mxu0 0.0
    %1089 = vmatpush1.xpose.msra.mxu0 0.0
    %1090 = vmatprep.subr.mxu0 0.0
    %1091 = vmatpush1.xpose.msra.mxu0 0.0
    %1092 = vmatprep.subr.mxu0 0.0
    %1093 = vmatpush1.xpose.msra.mxu0 0.0
    %1094 = vmatprep.subr.mxu0 0.0
    %1095 = vmatpush1.xpose.msra.mxu0 0.0
    %1096 = vmatprep.subr.mxu0 0.0
    %1097 = vmatpush1.xpose.msra.mxu0 0.0
    %1098 = vmatprep.subr.mxu0 0.0
    %1099 = vmatpush1.xpose.msra.mxu0 0.0
    %1100 = vmatprep.subr.mxu0 0.0
    %1101 = vmatpush1.xpose.msra.mxu0 0.0
    %1102 = vmatprep.subr.mxu0 0.0
    %1103 = vmatpush1.xpose.msra.mxu0 0.0
    %1104 = vmatprep.subr.mxu0 0.0
    %1105 = vmatpush1.xpose.msra.mxu0 0.0
    %1106 = vmatprep.subr.mxu0 0.0
    %1107 = vmatpush1.xpose.msra.mxu0 0.0
    %1108 = vmatprep.subr.mxu0 0.0
    %1109 = vmatpush1.xpose.msra.mxu0 0.0
    %1110 = vmatprep.subr.mxu0 0.0
    %1111 = vmatpush1.xpose.msra.mxu0 0.0
    %1112 = vmatprep.subr.mxu0 0.0
    %1113 = vmatpush1.xpose.msra.mxu0 0.0
    %1114 = vmatprep.subr.mxu0 0.0
    %1115 = vmatpush1.xpose.msra.mxu0 0.0
    %1116 = vmatprep.subr.mxu0 0.0
    %1117 = vmatpush1.xpose.msra.mxu0 0.0
    %1118 = vmatprep.subr.mxu0 0.0
    %1119 = vmatpush1.xpose.msra.mxu0 0.0
    %1120 = vmatprep.subr.mxu0 0.0
    %1121 = vmatpush1.xpose.msra.mxu0 0.0
    %1122 = vmatprep.subr.mxu0 0.0
    %1123 = vmatpush1.xpose.msra.mxu0 0.0
    %1124 = vmatprep.mubr.f32.mxu0 0.0
    %1125 = vmatmul.mubr.f32.gmra.mrb[0].mxu0 %v1055
    %v1126 = vpop.f32.mrb[0].mxu0
    %v1127 = vadd.f32 %v1052, %v1126
    %v1128 = vpop.f32.mrb[0].mxu0
    %1129 = vdwg.mxu0
    %v1131 = vsel %vm1053, %v768, 0
    %v1134 = vsel %vm1053, %v772, 0
    %1136 = vmatprep.subr.mxu0 0.0
    %1137 = vmatpush1.xpose.msra.mxu0 %v1134
    %1138 = vmatprep.subr.mxu0 0.0
    %1139 = vmatpush1.xpose.msra.mxu0 0.0
    %1140 = vmatprep.subr.mxu0 0.0
    %1141 = vmatpush1.xpose.msra.mxu0 0.0
    %1142 = vmatprep.subr.mxu0 0.0
    %1143 = vmatpush1.xpose.msra.mxu0 0.0
    %1144 = vmatprep.subr.mxu0 0.0
    %1145 = vmatpush1.xpose.msra.mxu0 0.0
    %1146 = vmatprep.subr.mxu0 0.0
    %1147 = vmatpush1.xpose.msra.mxu0 0.0
    %1148 = vmatprep.subr.mxu0 0.0
    %1149 = vmatpush1.xpose.msra.mxu0 0.0
    %1150 = vmatprep.subr.mxu0 0.0
    %1151 = vmatpush1.xpose.msra.mxu0 0.0
    %1152 = vmatprep.subr.mxu0 0.0
    %1153 = vmatpush1.xpose.msra.mxu0 0.0
    %1154 = vmatprep.subr.mxu0 0.0
    %1155 = vmatpush1.xpose.msra.mxu0 0.0
    %1156 = vmatprep.subr.mxu0 0.0
    %1157 = vmatpush1.xpose.msra.mxu0 0.0
    %1158 = vmatprep.subr.mxu0 0.0
    %1159 = vmatpush1.xpose.msra.mxu0 0.0
    %1160 = vmatprep.subr.mxu0 0.0
    %1161 = vmatpush1.xpose.msra.mxu0 0.0
    %1162 = vmatprep.subr.mxu0 0.0
    %1163 = vmatpush1.xpose.msra.mxu0 0.0
    %1164 = vmatprep.subr.mxu0 0.0
    %1165 = vmatpush1.xpose.msra.mxu0 0.0
    %1166 = vmatprep.subr.mxu0 0.0
    %1167 = vmatpush1.xpose.msra.mxu0 0.0
    %1168 = vmatprep.subr.mxu0 0.0
    %1169 = vmatpush1.xpose.msra.mxu0 0.0
    %1170 = vmatprep.subr.mxu0 0.0
    %1171 = vmatpush1.xpose.msra.mxu0 0.0
    %1172 = vmatprep.subr.mxu0 0.0
    %1173 = vmatpush1.xpose.msra.mxu0 0.0
    %1174 = vmatprep.subr.mxu0 0.0
    %1175 = vmatpush1.xpose.msra.mxu0 0.0
    %1176 = vmatprep.subr.mxu0 0.0
    %1177 = vmatpush1.xpose.msra.mxu0 0.0
    %1178 = vmatprep.subr.mxu0 0.0
    %1179 = vmatpush1.xpose.msra.mxu0 0.0
    %1180 = vmatprep.subr.mxu0 0.0
    %1181 = vmatpush1.xpose.msra.mxu0 0.0
    %1182 = vmatprep.subr.mxu0 0.0
    %1183 = vmatpush1.xpose.msra.mxu0 0.0
    %1184 = vmatprep.subr.mxu0 0.0
    %1185 = vmatpush1.xpose.msra.mxu0 0.0
    %1186 = vmatprep.subr.mxu0 0.0
    %1187 = vmatpush1.xpose.msra.mxu0 0.0
    %1188 = vmatprep.subr.mxu0 0.0
    %1189 = vmatpush1.xpose.msra.mxu0 0.0
    %1190 = vmatprep.subr.mxu0 0.0
    %1191 = vmatpush1.xpose.msra.mxu0 0.0
    %1192 = vmatprep.subr.mxu0 0.0
    %1193 = vmatpush1.xpose.msra.mxu0 0.0
    %1194 = vmatprep.subr.mxu0 0.0
    %1195 = vmatpush1.xpose.msra.mxu0 0.0
    %1196 = vmatprep.subr.mxu0 0.0
    %1197 = vmatpush1.xpose.msra.mxu0 0.0
    %1198 = vmatprep.subr.mxu0 0.0
    %1199 = vmatpush1.xpose.msra.mxu0 0.0
    %1200 = vmatprep.mubr.f32.mxu0 0.0
    %1201 = vmatmul.mubr.f32.gmra.mrb[0].mxu0 %v1131
    %v1202 = vpop.f32.mrb[0].mxu0
    %v1203 = vadd.f32 %v1052, %v1202
    %v1204 = vpop.f32.mrb[0].mxu0
    %1205 = vdwg.mxu0
    %v1207 = vsel %vm1053, %v769, 0
    %v1210 = vsel %vm1053, %v773, 0
    %1212 = vmatprep.subr.mxu0 0.0
    %1213 = vmatpush1.xpose.msra.mxu0 %v1210
    %1214 = vmatprep.subr.mxu0 0.0
    %1215 = vmatpush1.xpose.msra.mxu0 0.0
    %1216 = vmatprep.subr.mxu0 0.0
    %1217 = vmatpush1.xpose.msra.mxu0 0.0
    %1218 = vmatprep.subr.mxu0 0.0
    %1219 = vmatpush1.xpose.msra.mxu0 0.0
    %1220 = vmatprep.subr.mxu0 0.0
    %1221 = vmatpush1.xpose.msra.mxu0 0.0
    %1222 = vmatprep.subr.mxu0 0.0
    %1223 = vmatpush1.xpose.msra.mxu0 0.0
    %1224 = vmatprep.subr.mxu0 0.0
    %1225 = vmatpush1.xpose.msra.mxu0 0.0
    %1226 = vmatprep.subr.mxu0 0.0
    %1227 = vmatpush1.xpose.msra.mxu0 0.0
    %1228 = vmatprep.subr.mxu0 0.0
    %1229 = vmatpush1.xpose.msra.mxu0 0.0
    %1230 = vmatprep.subr.mxu0 0.0
    %1231 = vmatpush1.xpose.msra.mxu0 0.0
    %1232 = vmatprep.subr.mxu0 0.0
    %1233 = vmatpush1.xpose.msra.mxu0 0.0
    %1234 = vmatprep.subr.mxu0 0.0
    %1235 = vmatpush1.xpose.msra.mxu0 0.0
    %1236 = vmatprep.subr.mxu0 0.0
    %1237 = vmatpush1.xpose.msra.mxu0 0.0
    %1238 = vmatprep.subr.mxu0 0.0
    %1239 = vmatpush1.xpose.msra.mxu0 0.0
    %1240 = vmatprep.subr.mxu0 0.0
    %1241 = vmatpush1.xpose.msra.mxu0 0.0
    %1242 = vmatprep.subr.mxu0 0.0
    %1243 = vmatpush1.xpose.msra.mxu0 0.0
    %1244 = vmatprep.subr.mxu0 0.0
    %1245 = vmatpush1.xpose.msra.mxu0 0.0
    %1246 = vmatprep.subr.mxu0 0.0
    %1247 = vmatpush1.xpose.msra.mxu0 0.0
    %1248 = vmatprep.subr.mxu0 0.0
    %1249 = vmatpush1.xpose.msra.mxu0 0.0
    %1250 = vmatprep.subr.mxu0 0.0
    %1251 = vmatpush1.xpose.msra.mxu0 0.0
    %1252 = vmatprep.subr.mxu0 0.0
    %1253 = vmatpush1.xpose.msra.mxu0 0.0
    %1254 = vmatprep.subr.mxu0 0.0
    %1255 = vmatpush1.xpose.msra.mxu0 0.0
    %1256 = vmatprep.subr.mxu0 0.0
    %1257 = vmatpush1.xpose.msra.mxu0 0.0
    %1258 = vmatprep.subr.mxu0 0.0
    %1259 = vmatpush1.xpose.msra.mxu0 0.0
    %1260 = vmatprep.subr.mxu0 0.0
    %1261 = vmatpush1.xpose.msra.mxu0 0.0
    %1262 = vmatprep.subr.mxu0 0.0
    %1263 = vmatpush1.xpose.msra.mxu0 0.0
    %1264 = vmatprep.subr.mxu0 0.0
    %1265 = vmatpush1.xpose.msra.mxu0 0.0
    %1266 = vmatprep.subr.mxu0 0.0
    %1267 = vmatpush1.xpose.msra.mxu0 0.0
    %1268 = vmatprep.subr.mxu0 0.0
    %1269 = vmatpush1.xpose.msra.mxu0 0.0
    %1270 = vmatprep.subr.mxu0 0.0
    %1271 = vmatpush1.xpose.msra.mxu0 0.0
    %1272 = vmatprep.subr.mxu0 0.0
    %1273 = vmatpush1.xpose.msra.mxu0 0.0
    %1274 = vmatprep.subr.mxu0 0.0
    %1275 = vmatpush1.xpose.msra.mxu0 0.0
    %1276 = vmatprep.mubr.f32.mxu0 0.0
    %1277 = vmatmul.mubr.f32.gmra.mrb[0].mxu0 %v1207
    %v1278 = vpop.f32.mrb[0].mxu0
    %v1279 = vadd.f32 %v1052, %v1278
    %v1280 = vpop.f32.mrb[0].mxu0
    %1281 = vdwg.mxu0
    %v1283 = vsel %vm1053, %v770, 0
    %v1286 = vsel %vm1053, %v774, 0
    %1288 = vmatprep.subr.mxu0 0.0
    %1289 = vmatpush1.xpose.msra.mxu0 %v1286
    %1290 = vmatprep.subr.mxu0 0.0
    %1291 = vmatpush1.xpose.msra.mxu0 0.0
    %1292 = vmatprep.subr.mxu0 0.0
    %1293 = vmatpush1.xpose.msra.mxu0 0.0
    %1294 = vmatprep.subr.mxu0 0.0
    %1295 = vmatpush1.xpose.msra.mxu0 0.0
    %1296 = vmatprep.subr.mxu0 0.0
    %1297 = vmatpush1.xpose.msra.mxu0 0.0
    %1298 = vmatprep.subr.mxu0 0.0
    %1299 = vmatpush1.xpose.msra.mxu0 0.0
    %1300 = vmatprep.subr.mxu0 0.0
    %1301 = vmatpush1.xpose.msra.mxu0 0.0
    %1302 = vmatprep.subr.mxu0 0.0
    %1303 = vmatpush1.xpose.msra.mxu0 0.0
    %1304 = vmatprep.subr.mxu0 0.0
    %1305 = vmatpush1.xpose.msra.mxu0 0.0
    %1306 = vmatprep.subr.mxu0 0.0
    %1307 = vmatpush1.xpose.msra.mxu0 0.0
    %1308 = vmatprep.subr.mxu0 0.0
    %1309 = vmatpush1.xpose.msra.mxu0 0.0
    %1310 = vmatprep.subr.mxu0 0.0
    %1311 = vmatpush1.xpose.msra.mxu0 0.0
    %1312 = vmatprep.subr.mxu0 0.0
    %1313 = vmatpush1.xpose.msra.mxu0 0.0
    %1314 = vmatprep.subr.mxu0 0.0
    %1315 = vmatpush1.xpose.msra.mxu0 0.0
    %1316 = vmatprep.subr.mxu0 0.0
    %1317 = vmatpush1.xpose.msra.mxu0 0.0
    %1318 = vmatprep.subr.mxu0 0.0
    %1319 = vmatpush1.xpose.msra.mxu0 0.0
    %1320 = vmatprep.subr.mxu0 0.0
    %1321 = vmatpush1.xpose.msra.mxu0 0.0
    %1322 = vmatprep.subr.mxu0 0.0
    %1323 = vmatpush1.xpose.msra.mxu0 0.0
    %1324 = vmatprep.subr.mxu0 0.0
    %1325 = vmatpush1.xpose.msra.mxu0 0.0
    %1326 = vmatprep.subr.mxu0 0.0
    %1327 = vmatpush1.xpose.msra.mxu0 0.0
    %1328 = vmatprep.subr.mxu0 0.0
    %1329 = vmatpush1.xpose.msra.mxu0 0.0
    %1330 = vmatprep.subr.mxu0 0.0
    %1331 = vmatpush1.xpose.msra.mxu0 0.0
    %1332 = vmatprep.subr.mxu0 0.0
    %1333 = vmatpush1.xpose.msra.mxu0 0.0
    %1334 = vmatprep.subr.mxu0 0.0
    %1335 = vmatpush1.xpose.msra.mxu0 0.0
    %1336 = vmatprep.subr.mxu0 0.0
    %1337 = vmatpush1.xpose.msra.mxu0 0.0
    %1338 = vmatprep.subr.mxu0 0.0
    %1339 = vmatpush1.xpose.msra.mxu0 0.0
    %1340 = vmatprep.subr.mxu0 0.0
    %1341 = vmatpush1.xpose.msra.mxu0 0.0
    %1342 = vmatprep.subr.mxu0 0.0
    %1343 = vmatpush1.xpose.msra.mxu0 0.0
    %1344 = vmatprep.subr.mxu0 0.0
    %1345 = vmatpush1.xpose.msra.mxu0 0.0
    %1346 = vmatprep.subr.mxu0 0.0
    %1347 = vmatpush1.xpose.msra.mxu0 0.0
    %1348 = vmatprep.subr.mxu0 0.0
    %1349 = vmatpush1.xpose.msra.mxu0 0.0
    %1350 = vmatprep.subr.mxu0 0.0
    %1351 = vmatpush1.xpose.msra.mxu0 0.0
    %1352 = vmatprep.mubr.f32.mxu0 0.0
    %1353 = vmatmul.mubr.f32.gmra.mrb[0].mxu0 %v1283
    %v1354 = vpop.f32.mrb[0].mxu0
    %v1355 = vadd.f32 %v1052, %v1354
    %v1356 = vpop.f32.mrb[0].mxu0
    %1357 = vdwg.mxu0
    %v1359 = vsel %vm1053, %v971, 0
    %v1362 = vsel %vm1053, %v975, 0
    %1364 = vmatprep.subr.mxu0 0.0
    %1365 = vmatpush1.xpose.msra.mxu0 %v1362
    %1366 = vmatprep.subr.mxu0 0.0
    %1367 = vmatpush1.xpose.msra.mxu0 0.0
    %1368 = vmatprep.subr.mxu0 0.0
    %1369 = vmatpush1.xpose.msra.mxu0 0.0
    %1370 = vmatprep.subr.mxu0 0.0
    %1371 = vmatpush1.xpose.msra.mxu0 0.0
    %1372 = vmatprep.subr.mxu0 0.0
    %1373 = vmatpush1.xpose.msra.mxu0 0.0
    %1374 = vmatprep.subr.mxu0 0.0
    %1375 = vmatpush1.xpose.msra.mxu0 0.0
    %1376 = vmatprep.subr.mxu0 0.0
    %1377 = vmatpush1.xpose.msra.mxu0 0.0
    %1378 = vmatprep.subr.mxu0 0.0
    %1379 = vmatpush1.xpose.msra.mxu0 0.0
    %1380 = vmatprep.subr.mxu0 0.0
    %1381 = vmatpush1.xpose.msra.mxu0 0.0
    %1382 = vmatprep.subr.mxu0 0.0
    %1383 = vmatpush1.xpose.msra.mxu0 0.0
    %1384 = vmatprep.subr.mxu0 0.0
    %1385 = vmatpush1.xpose.msra.mxu0 0.0
    %1386 = vmatprep.subr.mxu0 0.0
    %1387 = vmatpush1.xpose.msra.mxu0 0.0
    %1388 = vmatprep.subr.mxu0 0.0
    %1389 = vmatpush1.xpose.msra.mxu0 0.0
    %1390 = vmatprep.subr.mxu0 0.0
    %1391 = vmatpush1.xpose.msra.mxu0 0.0
    %1392 = vmatprep.subr.mxu0 0.0
    %1393 = vmatpush1.xpose.msra.mxu0 0.0
    %1394 = vmatprep.subr.mxu0 0.0
    %1395 = vmatpush1.xpose.msra.mxu0 0.0
    %1396 = vmatprep.subr.mxu0 0.0
    %1397 = vmatpush1.xpose.msra.mxu0 0.0
    %1398 = vmatprep.subr.mxu0 0.0
    %1399 = vmatpush1.xpose.msra.mxu0 0.0
    %1400 = vmatprep.subr.mxu0 0.0
    %1401 = vmatpush1.xpose.msra.mxu0 0.0
    %1402 = vmatprep.subr.mxu0 0.0
    %1403 = vmatpush1.xpose.msra.mxu0 0.0
    %1404 = vmatprep.subr.mxu0 0.0
    %1405 = vmatpush1.xpose.msra.mxu0 0.0
    %1406 = vmatprep.subr.mxu0 0.0
    %1407 = vmatpush1.xpose.msra.mxu0 0.0
    %1408 = vmatprep.subr.mxu0 0.0
    %1409 = vmatpush1.xpose.msra.mxu0 0.0
    %1410 = vmatprep.subr.mxu0 0.0
    %1411 = vmatpush1.xpose.msra.mxu0 0.0
    %1412 = vmatprep.subr.mxu0 0.0
    %1413 = vmatpush1.xpose.msra.mxu0 0.0
    %1414 = vmatprep.subr.mxu0 0.0
    %1415 = vmatpush1.xpose.msra.mxu0 0.0
    %1416 = vmatprep.subr.mxu0 0.0
    %1417 = vmatpush1.xpose.msra.mxu0 0.0
    %1418 = vmatprep.subr.mxu0 0.0
    %1419 = vmatpush1.xpose.msra.mxu0 0.0
    %1420 = vmatprep.subr.mxu0 0.0
    %1421 = vmatpush1.xpose.msra.mxu0 0.0
    %1422 = vmatprep.subr.mxu0 0.0
    %1423 = vmatpush1.xpose.msra.mxu0 0.0
    %1424 = vmatprep.subr.mxu0 0.0
    %1425 = vmatpush1.xpose.msra.mxu0 0.0
    %1426 = vmatprep.subr.mxu0 0.0
    %1427 = vmatpush1.xpose.msra.mxu0 0.0
    %1428 = vmatprep.mubr.f32.mxu0 0.0
    %1429 = vmatmul.mubr.f32.gmra.mrb[0].mxu0 %v1359
    %v1430 = vpop.f32.mrb[0].mxu0
    %v1431 = vadd.f32 %v1052, %v1430
    %v1432 = vpop.f32.mrb[0].mxu0
    %1433 = vdwg.mxu0
    %v1435 = vsel %vm1053, %v972, 0
    %v1438 = vsel %vm1053, %v976, 0
    %1440 = vmatprep.subr.mxu0 0.0
    %1441 = vmatpush1.xpose.msra.mxu0 %v1438
    %1442 = vmatprep.subr.mxu0 0.0
    %1443 = vmatpush1.xpose.msra.mxu0 0.0
    %1444 = vmatprep.subr.mxu0 0.0
    %1445 = vmatpush1.xpose.msra.mxu0 0.0
    %1446 = vmatprep.subr.mxu0 0.0
    %1447 = vmatpush1.xpose.msra.mxu0 0.0
    %1448 = vmatprep.subr.mxu0 0.0
    %1449 = vmatpush1.xpose.msra.mxu0 0.0
    %1450 = vmatprep.subr.mxu0 0.0
    %1451 = vmatpush1.xpose.msra.mxu0 0.0
    %1452 = vmatprep.subr.mxu0 0.0
    %1453 = vmatpush1.xpose.msra.mxu0 0.0
    %1454 = vmatprep.subr.mxu0 0.0
    %1455 = vmatpush1.xpose.msra.mxu0 0.0
    %1456 = vmatprep.subr.mxu0 0.0
    %1457 = vmatpush1.xpose.msra.mxu0 0.0
    %1458 = vmatprep.subr.mxu0 0.0
    %1459 = vmatpush1.xpose.msra.mxu0 0.0
    %1460 = vmatprep.subr.mxu0 0.0
    %1461 = vmatpush1.xpose.msra.mxu0 0.0
    %1462 = vmatprep.subr.mxu0 0.0
    %1463 = vmatpush1.xpose.msra.mxu0 0.0
    %1464 = vmatprep.subr.mxu0 0.0
    %1465 = vmatpush1.xpose.msra.mxu0 0.0
    %1466 = vmatprep.subr.mxu0 0.0
    %1467 = vmatpush1.xpose.msra.mxu0 0.0
    %1468 = vmatprep.subr.mxu0 0.0
    %1469 = vmatpush1.xpose.msra.mxu0 0.0
    %1470 = vmatprep.subr.mxu0 0.0
    %1471 = vmatpush1.xpose.msra.mxu0 0.0
    %1472 = vmatprep.subr.mxu0 0.0
    %1473 = vmatpush1.xpose.msra.mxu0 0.0
    %1474 = vmatprep.subr.mxu0 0.0
    %1475 = vmatpush1.xpose.msra.mxu0 0.0
    %1476 = vmatprep.subr.mxu0 0.0
    %1477 = vmatpush1.xpose.msra.mxu0 0.0
    %1478 = vmatprep.subr.mxu0 0.0
    %1479 = vmatpush1.xpose.msra.mxu0 0.0
    %1480 = vmatprep.subr.mxu0 0.0
    %1481 = vmatpush1.xpose.msra.mxu0 0.0
    %1482 = vmatprep.subr.mxu0 0.0
    %1483 = vmatpush1.xpose.msra.mxu0 0.0
    %1484 = vmatprep.subr.mxu0 0.0
    %1485 = vmatpush1.xpose.msra.mxu0 0.0
    %1486 = vmatprep.subr.mxu0 0.0
    %1487 = vmatpush1.xpose.msra.mxu0 0.0
    %1488 = vmatprep.subr.mxu0 0.0
    %1489 = vmatpush1.xpose.msra.mxu0 0.0
    %1490 = vmatprep.subr.mxu0 0.0
    %1491 = vmatpush1.xpose.msra.mxu0 0.0
    %1492 = vmatprep.subr.mxu0 0.0
    %1493 = vmatpush1.xpose.msra.mxu0 0.0
    %1494 = vmatprep.subr.mxu0 0.0
    %1495 = vmatpush1.xpose.msra.mxu0 0.0
    %1496 = vmatprep.subr.mxu0 0.0
    %1497 = vmatpush1.xpose.msra.mxu0 0.0
    %1498 = vmatprep.subr.mxu0 0.0
    %1499 = vmatpush1.xpose.msra.mxu0 0.0
    %1500 = vmatprep.subr.mxu0 0.0
    %1501 = vmatpush1.xpose.msra.mxu0 0.0
    %1502 = vmatprep.subr.mxu0 0.0
    %1503 = vmatpush1.xpose.msra.mxu0 0.0
    %1504 = vmatprep.mubr.f32.mxu0 0.0
    %1505 = vmatmul.mubr.f32.gmra.mrb[0].mxu0 %v1435
    %v1506 = vpop.f32.mrb[0].mxu0
    %v1507 = vadd.f32 %v1052, %v1506
    %v1508 = vpop.f32.mrb[0].mxu0
    %1509 = vdwg.mxu0
    %v1511 = vsel %vm1053, %v973, 0
    %v1514 = vsel %vm1053, %v977, 0
    %1516 = vmatprep.subr.mxu0 0.0
    %1517 = vmatpush1.xpose.msra.mxu0 %v1514
    %1518 = vmatprep.subr.mxu0 0.0
    %1519 = vmatpush1.xpose.msra.mxu0 0.0
    %1520 = vmatprep.subr.mxu0 0.0
    %1521 = vmatpush1.xpose.msra.mxu0 0.0
    %1522 = vmatprep.subr.mxu0 0.0
    %1523 = vmatpush1.xpose.msra.mxu0 0.0
    %1524 = vmatprep.subr.mxu0 0.0
    %1525 = vmatpush1.xpose.msra.mxu0 0.0
    %1526 = vmatprep.subr.mxu0 0.0
    %1527 = vmatpush1.xpose.msra.mxu0 0.0
    %1528 = vmatprep.subr.mxu0 0.0
    %1529 = vmatpush1.xpose.msra.mxu0 0.0
    %1530 = vmatprep.subr.mxu0 0.0
    %1531 = vmatpush1.xpose.msra.mxu0 0.0
    %1532 = vmatprep.subr.mxu0 0.0
    %1533 = vmatpush1.xpose.msra.mxu0 0.0
    %1534 = vmatprep.subr.mxu0 0.0
    %1535 = vmatpush1.xpose.msra.mxu0 0.0
    %1536 = vmatprep.subr.mxu0 0.0
    %1537 = vmatpush1.xpose.msra.mxu0 0.0
    %1538 = vmatprep.subr.mxu0 0.0
    %1539 = vmatpush1.xpose.msra.mxu0 0.0
    %1540 = vmatprep.subr.mxu0 0.0
    %1541 = vmatpush1.xpose.msra.mxu0 0.0
    %1542 = vmatprep.subr.mxu0 0.0
    %1543 = vmatpush1.xpose.msra.mxu0 0.0
    %1544 = vmatprep.subr.mxu0 0.0
    %1545 = vmatpush1.xpose.msra.mxu0 0.0
    %1546 = vmatprep.subr.mxu0 0.0
    %1547 = vmatpush1.xpose.msra.mxu0 0.0
    %1548 = vmatprep.subr.mxu0 0.0
    %1549 = vmatpush1.xpose.msra.mxu0 0.0
    %1550 = vmatprep.subr.mxu0 0.0
    %1551 = vmatpush1.xpose.msra.mxu0 0.0
    %1552 = vmatprep.subr.mxu0 0.0
    %1553 = vmatpush1.xpose.msra.mxu0 0.0
    %1554 = vmatprep.subr.mxu0 0.0
    %1555 = vmatpush1.xpose.msra.mxu0 0.0
    %1556 = vmatprep.subr.mxu0 0.0
    %1557 = vmatpush1.xpose.msra.mxu0 0.0
    %1558 = vmatprep.subr.mxu0 0.0
    %1559 = vmatpush1.xpose.msra.mxu0 0.0
    %1560 = vmatprep.subr.mxu0 0.0
    %1561 = vmatpush1.xpose.msra.mxu0 0.0
    %1562 = vmatprep.subr.mxu0 0.0
    %1563 = vmatpush1.xpose.msra.mxu0 0.0
    %1564 = vmatprep.subr.mxu0 0.0
    %1565 = vmatpush1.xpose.msra.mxu0 0.0
    %1566 = vmatprep.subr.mxu0 0.0
    %1567 = vmatpush1.xpose.msra.mxu0 0.0
    %1568 = vmatprep.subr.mxu0 0.0
    %1569 = vmatpush1.xpose.msra.mxu0 0.0
    %1570 = vmatprep.subr.mxu0 0.0
    %1571 = vmatpush1.xpose.msra.mxu0 0.0
    %1572 = vmatprep.subr.mxu0 0.0
    %1573 = vmatpush1.xpose.msra.mxu0 0.0
    %1574 = vmatprep.subr.mxu0 0.0
    %1575 = vmatpush1.xpose.msra.mxu0 0.0
    %1576 = vmatprep.subr.mxu0 0.0
    %1577 = vmatpush1.xpose.msra.mxu0 0.0
    %1578 = vmatprep.subr.mxu0 0.0
    %1579 = vmatpush1.xpose.msra.mxu0 0.0
    %1580 = vmatprep.mubr.f32.mxu0 0.0
    %1581 = vmatmul.mubr.f32.gmra.mrb[0].mxu0 %v1511
    %v1582 = vpop.f32.mrb[0].mxu0
    %v1583 = vadd.f32 %v1052, %v1582
    %v1584 = vpop.f32.mrb[0].mxu0
    %1585 = vdwg.mxu0
    %v1587 = vsel %vm1053, %v974, 0
    %v1590 = vsel %vm1053, %v978, 0
    %1592 = vmatprep.subr.mxu0 0.0
    %1593 = vmatpush1.xpose.msra.mxu0 %v1590
    %1594 = vmatprep.subr.mxu0 0.0
    %1595 = vmatpush1.xpose.msra.mxu0 0.0
    %1596 = vmatprep.subr.mxu0 0.0
    %1597 = vmatpush1.xpose.msra.mxu0 0.0
    %1598 = vmatprep.subr.mxu0 0.0
    %1599 = vmatpush1.xpose.msra.mxu0 0.0
    %1600 = vmatprep.subr.mxu0 0.0
    %1601 = vmatpush1.xpose.msra.mxu0 0.0
    %1602 = vmatprep.subr.mxu0 0.0
    %1603 = vmatpush1.xpose.msra.mxu0 0.0
    %1604 = vmatprep.subr.mxu0 0.0
    %1605 = vmatpush1.xpose.msra.mxu0 0.0
    %1606 = vmatprep.subr.mxu0 0.0
    %1607 = vmatpush1.xpose.msra.mxu0 0.0
    %1608 = vmatprep.subr.mxu0 0.0
    %1609 = vmatpush1.xpose.msra.mxu0 0.0
    %1610 = vmatprep.subr.mxu0 0.0
    %1611 = vmatpush1.xpose.msra.mxu0 0.0
    %1612 = vmatprep.subr.mxu0 0.0
    %1613 = vmatpush1.xpose.msra.mxu0 0.0
    %1614 = vmatprep.subr.mxu0 0.0
    %1615 = vmatpush1.xpose.msra.mxu0 0.0
    %1616 = vmatprep.subr.mxu0 0.0
    %1617 = vmatpush1.xpose.msra.mxu0 0.0
    %1618 = vmatprep.subr.mxu0 0.0
    %1619 = vmatpush1.xpose.msra.mxu0 0.0
    %1620 = vmatprep.subr.mxu0 0.0
    %1621 = vmatpush1.xpose.msra.mxu0 0.0
    %1622 = vmatprep.subr.mxu0 0.0
    %1623 = vmatpush1.xpose.msra.mxu0 0.0
    %1624 = vmatprep.subr.mxu0 0.0
    %1625 = vmatpush1.xpose.msra.mxu0 0.0
    %1626 = vmatprep.subr.mxu0 0.0
    %1627 = vmatpush1.xpose.msra.mxu0 0.0
    %1628 = vmatprep.subr.mxu0 0.0
    %1629 = vmatpush1.xpose.msra.mxu0 0.0
    %1630 = vmatprep.subr.mxu0 0.0
    %1631 = vmatpush1.xpose.msra.mxu0 0.0
    %1632 = vmatprep.subr.mxu0 0.0
    %1633 = vmatpush1.xpose.msra.mxu0 0.0
    %1634 = vmatprep.subr.mxu0 0.0
    %1635 = vmatpush1.xpose.msra.mxu0 0.0
    %1636 = vmatprep.subr.mxu0 0.0
    %1637 = vmatpush1.xpose.msra.mxu0 0.0
    %1638 = vmatprep.subr.mxu0 0.0
    %1639 = vmatpush1.xpose.msra.mxu0 0.0
    %1640 = vmatprep.subr.mxu0 0.0
    %1641 = vmatpush1.xpose.msra.mxu0 0.0
    %1642 = vmatprep.subr.mxu0 0.0
    %1643 = vmatpush1.xpose.msra.mxu0 0.0
    %1644 = vmatprep.subr.mxu0 0.0
    %1645 = vmatpush1.xpose.msra.mxu0 0.0
    %1646 = vmatprep.subr.mxu0 0.0
    %1647 = vmatpush1.xpose.msra.mxu0 0.0
    %1648 = vmatprep.subr.mxu0 0.0
    %1649 = vmatpush1.xpose.msra.mxu0 0.0
    %1650 = vmatprep.subr.mxu0 0.0
    %1651 = vmatpush1.xpose.msra.mxu0 0.0
    %1652 = vmatprep.subr.mxu0 0.0
    %1653 = vmatpush1.xpose.msra.mxu0 0.0
    %1654 = vmatprep.subr.mxu0 0.0
    %1655 = vmatpush1.xpose.msra.mxu0 0.0
    %1656 = vmatprep.mubr.f32.mxu0 0.0
    %1657 = vmatmul.mubr.f32.gmra.mrb[0].mxu0 %v1587
    %v1658 = vpop.f32.mrb[0].mxu0
    %v1659 = vadd.f32 %v1052, %v1658
    %v1660 = vpop.f32.mrb[0].mxu0
    %1661 = vdwg.mxu0
    %v1662 = vsel %vm1053, %v1127, -inf
    %1663 = vmax.xlane.f32.xlu0 %v1662
    %v1664 = vpop.xlane.xlu0 %1663
    %v1665 = vsel %vm1053, %v1203, -inf
    %1666 = vmax.xlane.f32.xlu0 %v1665
    %v1667 = vpop.xlane.xlu0 %1666
    %v1668 = vsel %vm1053, %v1279, -inf
    %1669 = vmax.xlane.f32.xlu0 %v1668
    %v1670 = vpop.xlane.xlu0 %1669
    %v1671 = vsel %vm1053, %v1355, -inf
    %1672 = vmax.xlane.f32.xlu0 %v1671
    %v1673 = vpop.xlane.xlu0 %1672
    %v1674 = vsel %vm1053, %v1431, -inf
    %1675 = vmax.xlane.f32.xlu0 %v1674
    %v1676 = vpop.xlane.xlu0 %1675
    %v1677 = vsel %vm1053, %v1507, -inf
    %1678 = vmax.xlane.f32.xlu0 %v1677
    %v1679 = vpop.xlane.xlu0 %1678
    %v1680 = vsel %vm1053, %v1583, -inf
    %1681 = vmax.xlane.f32.xlu0 %v1680
    %v1682 = vpop.xlane.xlu0 %1681
    %v1683 = vsel %vm1053, %v1659, -inf
    %1684 = vmax.xlane.f32.xlu0 %v1683
    %v1685 = vpop.xlane.xlu0 %1684
    %v1686 = vsub.f32 %v1127, %v1664
    %v1687 = vsub.f32 %v1203, %v1667
    %v1688 = vsub.f32 %v1279, %v1670
    %v1689 = vsub.f32 %v1355, %v1673
    %v1690 = vsub.f32 %v1431, %v1676
    %v1691 = vsub.f32 %v1507, %v1679
    %v1692 = vsub.f32 %v1583, %v1682
    %v1693 = vsub.f32 %v1659, %v1685
    %v1694 = vmul.f32 %v1686, 1.442695
    %v1695 = vpow.pop %v1694
    %v1696 = vmul.f32 %v1687, 1.442695
    %v1697 = vpow.pop %v1696
    %v1698 = vmul.f32 %v1688, 1.442695
    %v1699 = vpow.pop %v1698
    %v1700 = vmul.f32 %v1689, 1.442695
    %v1701 = vpow.pop %v1700
    %v1702 = vmul.f32 %v1690, 1.442695
    %v1703 = vpow.pop %v1702
    %v1704 = vmul.f32 %v1691, 1.442695
    %v1705 = vpow.pop %v1704
    %v1706 = vmul.f32 %v1692, 1.442695
    %v1707 = vpow.pop %v1706
    %v1708 = vmul.f32 %v1693, 1.442695
    %v1709 = vpow.pop %v1708
    %v1710 = vsel %vm1053, %v1695, 0.0
    %1711 = vadd.xlane.f32.xlu0 %v1710
    %v1712 = vpop.xlane.xlu0 %1711
    %v1713 = vsel %vm1053, %v1697, 0.0
    %1714 = vadd.xlane.f32.xlu0 %v1713
    %v1715 = vpop.xlane.xlu0 %1714
    %v1716 = vsel %vm1053, %v1699, 0.0
    %1717 = vadd.xlane.f32.xlu0 %v1716
    %v1718 = vpop.xlane.xlu0 %1717
    %v1719 = vsel %vm1053, %v1701, 0.0
    %1720 = vadd.xlane.f32.xlu0 %v1719
    %v1721 = vpop.xlane.xlu0 %1720
    %v1722 = vsel %vm1053, %v1703, 0.0
    %1723 = vadd.xlane.f32.xlu0 %v1722
    %v1724 = vpop.xlane.xlu0 %1723
    %v1725 = vsel %vm1053, %v1705, 0.0
    %1726 = vadd.xlane.f32.xlu0 %v1725
    %v1727 = vpop.xlane.xlu0 %1726
    %v1728 = vsel %vm1053, %v1707, 0.0
    %1729 = vadd.xlane.f32.xlu0 %v1728
    %v1730 = vpop.xlane.xlu0 %1729
    %v1731 = vsel %vm1053, %v1709, 0.0
    %1732 = vadd.xlane.f32.xlu0 %v1731
    %v1733 = vpop.xlane.xlu0 %1732
    %v1734 = vrcp.pop %v1712
    %v1735 = vrcp.pop %v1715
    %v1736 = vrcp.pop %v1718
    %v1737 = vrcp.pop %v1721
    %v1738 = vrcp.pop %v1724
    %v1739 = vrcp.pop %v1727
    %v1740 = vrcp.pop %v1730
    %v1741 = vrcp.pop %v1733
    %v1742 = vmul.f32 %v1695, %v1734
    %v1743 = vmul.f32 %v1697, %v1735
    %v1744 = vmul.f32 %v1699, %v1736
    %v1745 = vmul.f32 %v1701, %v1737
    %v1746 = vmul.f32 %v1703, %v1738
    %v1747 = vmul.f32 %v1705, %v1739
    %v1748 = vmul.f32 %v1707, %v1740
    %v1749 = vmul.f32 %v1709, %v1741
    %v1751 = vsel %vm1053, %v1742, 0
    %1753 = vmatprep.subr.mxu0 0.0
    %1754 = vmatpush1.msra.mxu0 %v839
    %1755 = vmatprep.subr.mxu0 0.0
    %1756 = vmatpush1.msra.mxu0 0.0
    %1757 = vmatprep.subr.mxu0 0.0
    %1758 = vmatpush1.msra.mxu0 0.0
    %1759 = vmatprep.subr.mxu0 0.0
    %1760 = vmatpush1.msra.mxu0 0.0
    %1761 = vmatprep.subr.mxu0 0.0
    %1762 = vmatpush1.msra.mxu0 0.0
    %1763 = vmatprep.subr.mxu0 0.0
    %1764 = vmatpush1.msra.mxu0 0.0
    %1765 = vmatprep.subr.mxu0 0.0
    %1766 = vmatpush1.msra.mxu0 0.0
    %1767 = vmatprep.subr.mxu0 0.0
    %1768 = vmatpush1.msra.mxu0 0.0
    %1769 = vmatprep.subr.mxu0 0.0
    %1770 = vmatpush1.msra.mxu0 0.0
    %1771 = vmatprep.subr.mxu0 0.0
    %1772 = vmatpush1.msra.mxu0 0.0
    %1773 = vmatprep.subr.mxu0 0.0
    %1774 = vmatpush1.msra.mxu0 0.0
    %1775 = vmatprep.subr.mxu0 0.0
    %1776 = vmatpush1.msra.mxu0 0.0
    %1777 = vmatprep.subr.mxu0 0.0
    %1778 = vmatpush1.msra.mxu0 0.0
    %1779 = vmatprep.subr.mxu0 0.0
    %1780 = vmatpush1.msra.mxu0 0.0
    %1781 = vmatprep.subr.mxu0 0.0
    %1782 = vmatpush1.msra.mxu0 0.0
    %1783 = vmatprep.subr.mxu0 0.0
    %1784 = vmatpush1.msra.mxu0 0.0
    %1785 = vmatprep.subr.mxu0 0.0
    %1786 = vmatpush1.msra.mxu0 0.0
    %1787 = vmatprep.subr.mxu0 0.0
    %1788 = vmatpush1.msra.mxu0 0.0
    %1789 = vmatprep.subr.mxu0 0.0
    %1790 = vmatpush1.msra.mxu0 0.0
    %1791 = vmatprep.subr.mxu0 0.0
    %1792 = vmatpush1.msra.mxu0 0.0
    %1793 = vmatprep.subr.mxu0 0.0
    %1794 = vmatpush1.msra.mxu0 0.0
    %1795 = vmatprep.subr.mxu0 0.0
    %1796 = vmatpush1.msra.mxu0 0.0
    %1797 = vmatprep.subr.mxu0 0.0
    %1798 = vmatpush1.msra.mxu0 0.0
    %1799 = vmatprep.subr.mxu0 0.0
    %1800 = vmatpush1.msra.mxu0 0.0
    %1801 = vmatprep.subr.mxu0 0.0
    %1802 = vmatpush1.msra.mxu0 0.0
    %1803 = vmatprep.subr.mxu0 0.0
    %1804 = vmatpush1.msra.mxu0 0.0
    %1805 = vmatprep.subr.mxu0 0.0
    %1806 = vmatpush1.msra.mxu0 0.0
    %1807 = vmatprep.subr.mxu0 0.0
    %1808 = vmatpush1.msra.mxu0 0.0
    %1809 = vmatprep.subr.mxu0 0.0
    %1810 = vmatpush1.msra.mxu0 0.0
    %1811 = vmatprep.subr.mxu0 0.0
    %1812 = vmatpush1.msra.mxu0 0.0
    %1813 = vmatprep.subr.mxu0 0.0
    %1814 = vmatpush1.msra.mxu0 0.0
    %1815 = vmatprep.subr.mxu0 0.0
    %1816 = vmatpush1.msra.mxu0 0.0
    %1817 = vmatprep.mubr.f32.mxu0 0.0
    %1818 = vmatmul.mubr.f32.gmra.mrb[0].mxu0 %v1751
    %v1819 = vpop.f32.mrb[0].mxu0
    %v1820 = vadd.f32 0.0, %v1819
    %v1821 = vpop.f32.mrb[0].mxu0
    %1822 = vdwg.mxu0
    %v1824 = vsel %vm1053, %v1743, 0
    %1826 = vmatprep.subr.mxu0 0.0
    %1827 = vmatpush1.msra.mxu0 %v840
    %1828 = vmatprep.subr.mxu0 0.0
    %1829 = vmatpush1.msra.mxu0 0.0
    %1830 = vmatprep.subr.mxu0 0.0
    %1831 = vmatpush1.msra.mxu0 0.0
    %1832 = vmatprep.subr.mxu0 0.0
    %1833 = vmatpush1.msra.mxu0 0.0
    %1834 = vmatprep.subr.mxu0 0.0
    %1835 = vmatpush1.msra.mxu0 0.0
    %1836 = vmatprep.subr.mxu0 0.0
    %1837 = vmatpush1.msra.mxu0 0.0
    %1838 = vmatprep.subr.mxu0 0.0
    %1839 = vmatpush1.msra.mxu0 0.0
    %1840 = vmatprep.subr.mxu0 0.0
    %1841 = vmatpush1.msra.mxu0 0.0
    %1842 = vmatprep.subr.mxu0 0.0
    %1843 = vmatpush1.msra.mxu0 0.0
    %1844 = vmatprep.subr.mxu0 0.0
    %1845 = vmatpush1.msra.mxu0 0.0
    %1846 = vmatprep.subr.mxu0 0.0
    %1847 = vmatpush1.msra.mxu0 0.0
    %1848 = vmatprep.subr.mxu0 0.0
    %1849 = vmatpush1.msra.mxu0 0.0
    %1850 = vmatprep.subr.mxu0 0.0
    %1851 = vmatpush1.msra.mxu0 0.0
    %1852 = vmatprep.subr.mxu0 0.0
    %1853 = vmatpush1.msra.mxu0 0.0
    %1854 = vmatprep.subr.mxu0 0.0
    %1855 = vmatpush1.msra.mxu0 0.0
    %1856 = vmatprep.subr.mxu0 0.0
    %1857 = vmatpush1.msra.mxu0 0.0
    %1858 = vmatprep.subr.mxu0 0.0
    %1859 = vmatpush1.msra.mxu0 0.0
    %1860 = vmatprep.subr.mxu0 0.0
    %1861 = vmatpush1.msra.mxu0 0.0
    %1862 = vmatprep.subr.mxu0 0.0
    %1863 = vmatpush1.msra.mxu0 0.0
    %1864 = vmatprep.subr.mxu0 0.0
    %1865 = vmatpush1.msra.mxu0 0.0
    %1866 = vmatprep.subr.mxu0 0.0
    %1867 = vmatpush1.msra.mxu0 0.0
    %1868 = vmatprep.subr.mxu0 0.0
    %1869 = vmatpush1.msra.mxu0 0.0
    %1870 = vmatprep.subr.mxu0 0.0
    %1871 = vmatpush1.msra.mxu0 0.0
    %1872 = vmatprep.subr.mxu0 0.0
    %1873 = vmatpush1.msra.mxu0 0.0
    %1874 = vmatprep.subr.mxu0 0.0
    %1875 = vmatpush1.msra.mxu0 0.0
    %1876 = vmatprep.subr.mxu0 0.0
    %1877 = vmatpush1.msra.mxu0 0.0
    %1878 = vmatprep.subr.mxu0 0.0
    %1879 = vmatpush1.msra.mxu0 0.0
    %1880 = vmatprep.subr.mxu0 0.0
    %1881 = vmatpush1.msra.mxu0 0.0
    %1882 = vmatprep.subr.mxu0 0.0
    %1883 = vmatpush1.msra.mxu0 0.0
    %1884 = vmatprep.subr.mxu0 0.0
    %1885 = vmatpush1.msra.mxu0 0.0
    %1886 = vmatprep.subr.mxu0 0.0
    %1887 = vmatpush1.msra.mxu0 0.0
    %1888 = vmatprep.subr.mxu0 0.0
    %1889 = vmatpush1.msra.mxu0 0.0
    %1890 = vmatprep.mubr.f32.mxu0 0.0
    %1891 = vmatmul.mubr.f32.gmra.mrb[0].mxu0 %v1824
    %v1892 = vpop.f32.mrb[0].mxu0
    %v1893 = vadd.f32 0.0, %v1892
    %v1894 = vpop.f32.mrb[0].mxu0
    %1895 = vdwg.mxu0
    %v1897 = vsel %vm1053, %v1744, 0
    %1899 = vmatprep.subr.mxu0 0.0
    %1900 = vmatpush1.msra.mxu0 %v841
    %1901 = vmatprep.subr.mxu0 0.0
    %1902 = vmatpush1.msra.mxu0 0.0
    %1903 = vmatprep.subr.mxu0 0.0
    %1904 = vmatpush1.msra.mxu0 0.0
    %1905 = vmatprep.subr.mxu0 0.0
    %1906 = vmatpush1.msra.mxu0 0.0
    %1907 = vmatprep.subr.mxu0 0.0
    %1908 = vmatpush1.msra.mxu0 0.0
    %1909 = vmatprep.subr.mxu0 0.0
    %1910 = vmatpush1.msra.mxu0 0.0
    %1911 = vmatprep.subr.mxu0 0.0
    %1912 = vmatpush1.msra.mxu0 0.0
    %1913 = vmatprep.subr.mxu0 0.0
    %1914 = vmatpush1.msra.mxu0 0.0
    %1915 = vmatprep.subr.mxu0 0.0
    %1916 = vmatpush1.msra.mxu0 0.0
    %1917 = vmatprep.subr.mxu0 0.0
    %1918 = vmatpush1.msra.mxu0 0.0
    %1919 = vmatprep.subr.mxu0 0.0
    %1920 = vmatpush1.msra.mxu0 0.0
    %1921 = vmatprep.subr.mxu0 0.0
    %1922 = vmatpush1.msra.mxu0 0.0
    %1923 = vmatprep.subr.mxu0 0.0
    %1924 = vmatpush1.msra.mxu0 0.0
    %1925 = vmatprep.subr.mxu0 0.0
    %1926 = vmatpush1.msra.mxu0 0.0
    %1927 = vmatprep.subr.mxu0 0.0
    %1928 = vmatpush1.msra.mxu0 0.0
    %1929 = vmatprep.subr.mxu0 0.0
    %1930 = vmatpush1.msra.mxu0 0.0
    %1931 = vmatprep.subr.mxu0 0.0
    %1932 = vmatpush1.msra.mxu0 0.0
    %1933 = vmatprep.subr.mxu0 0.0
    %1934 = vmatpush1.msra.mxu0 0.0
    %1935 = vmatprep.subr.mxu0 0.0
    %1936 = vmatpush1.msra.mxu0 0.0
    %1937 = vmatprep.subr.mxu0 0.0
    %1938 = vmatpush1.msra.mxu0 0.0
    %1939 = vmatprep.subr.mxu0 0.0
    %1940 = vmatpush1.msra.mxu0 0.0
    %1941 = vmatprep.subr.mxu0 0.0
    %1942 = vmatpush1.msra.mxu0 0.0
    %1943 = vmatprep.subr.mxu0 0.0
    %1944 = vmatpush1.msra.mxu0 0.0
    %1945 = vmatprep.subr.mxu0 0.0
    %1946 = vmatpush1.msra.mxu0 0.0
    %1947 = vmatprep.subr.mxu0 0.0
    %1948 = vmatpush1.msra.mxu0 0.0
    %1949 = vmatprep.subr.mxu0 0.0
    %1950 = vmatpush1.msra.mxu0 0.0
    %1951 = vmatprep.subr.mxu0 0.0
    %1952 = vmatpush1.msra.mxu0 0.0
    %1953 = vmatprep.subr.mxu0 0.0
    %1954 = vmatpush1.msra.mxu0 0.0
    %1955 = vmatprep.subr.mxu0 0.0
    %1956 = vmatpush1.msra.mxu0 0.0
    %1957 = vmatprep.subr.mxu0 0.0
    %1958 = vmatpush1.msra.mxu0 0.0
    %1959 = vmatprep.subr.mxu0 0.0
    %1960 = vmatpush1.msra.mxu0 0.0
    %1961 = vmatprep.subr.mxu0 0.0
    %1962 = vmatpush1.msra.mxu0 0.0
    %1963 = vmatprep.mubr.f32.mxu0 0.0
    %1964 = vmatmul.mubr.f32.gmra.mrb[0].mxu0 %v1897
    %v1965 = vpop.f32.mrb[0].mxu0
    %v1966 = vadd.f32 0.0, %v1965
    %v1967 = vpop.f32.mrb[0].mxu0
    %1968 = vdwg.mxu0
    %v1970 = vsel %vm1053, %v1745, 0
    %1972 = vmatprep.subr.mxu0 0.0
    %1973 = vmatpush1.msra.mxu0 %v842
    %1974 = vmatprep.subr.mxu0 0.0
    %1975 = vmatpush1.msra.mxu0 0.0
    %1976 = vmatprep.subr.mxu0 0.0
    %1977 = vmatpush1.msra.mxu0 0.0
    %1978 = vmatprep.subr.mxu0 0.0
    %1979 = vmatpush1.msra.mxu0 0.0
    %1980 = vmatprep.subr.mxu0 0.0
    %1981 = vmatpush1.msra.mxu0 0.0
    %1982 = vmatprep.subr.mxu0 0.0
    %1983 = vmatpush1.msra.mxu0 0.0
    %1984 = vmatprep.subr.mxu0 0.0
    %1985 = vmatpush1.msra.mxu0 0.0
    %1986 = vmatprep.subr.mxu0 0.0
    %1987 = vmatpush1.msra.mxu0 0.0
    %1988 = vmatprep.subr.mxu0 0.0
    %1989 = vmatpush1.msra.mxu0 0.0
    %1990 = vmatprep.subr.mxu0 0.0
    %1991 = vmatpush1.msra.mxu0 0.0
    %1992 = vmatprep.subr.mxu0 0.0
    %1993 = vmatpush1.msra.mxu0 0.0
    %1994 = vmatprep.subr.mxu0 0.0
    %1995 = vmatpush1.msra.mxu0 0.0
    %1996 = vmatprep.subr.mxu0 0.0
    %1997 = vmatpush1.msra.mxu0 0.0
    %1998 = vmatprep.subr.mxu0 0.0
    %1999 = vmatpush1.msra.mxu0 0.0
    %2000 = vmatprep.subr.mxu0 0.0
    %2001 = vmatpush1.msra.mxu0 0.0
    %2002 = vmatprep.subr.mxu0 0.0
    %2003 = vmatpush1.msra.mxu0 0.0
    %2004 = vmatprep.subr.mxu0 0.0
    %2005 = vmatpush1.msra.mxu0 0.0
    %2006 = vmatprep.subr.mxu0 0.0
    %2007 = vmatpush1.msra.mxu0 0.0
    %2008 = vmatprep.subr.mxu0 0.0
    %2009 = vmatpush1.msra.mxu0 0.0
    %2010 = vmatprep.subr.mxu0 0.0
    %2011 = vmatpush1.msra.mxu0 0.0
    %2012 = vmatprep.subr.mxu0 0.0
    %2013 = vmatpush1.msra.mxu0 0.0
    %2014 = vmatprep.subr.mxu0 0.0
    %2015 = vmatpush1.msra.mxu0 0.0
    %2016 = vmatprep.subr.mxu0 0.0
    %2017 = vmatpush1.msra.mxu0 0.0
    %2018 = vmatprep.subr.mxu0 0.0
    %2019 = vmatpush1.msra.mxu0 0.0
    %2020 = vmatprep.subr.mxu0 0.0
    %2021 = vmatpush1.msra.mxu0 0.0
    %2022 = vmatprep.subr.mxu0 0.0
    %2023 = vmatpush1.msra.mxu0 0.0
    %2024 = vmatprep.subr.mxu0 0.0
    %2025 = vmatpush1.msra.mxu0 0.0
    %2026 = vmatprep.subr.mxu0 0.0
    %2027 = vmatpush1.msra.mxu0 0.0
    %2028 = vmatprep.subr.mxu0 0.0
    %2029 = vmatpush1.msra.mxu0 0.0
    %2030 = vmatprep.subr.mxu0 0.0
    %2031 = vmatpush1.msra.mxu0 0.0
    %2032 = vmatprep.subr.mxu0 0.0
    %2033 = vmatpush1.msra.mxu0 0.0
    %2034 = vmatprep.subr.mxu0 0.0
    %2035 = vmatpush1.msra.mxu0 0.0
    %2036 = vmatprep.mubr.f32.mxu0 0.0
    %2037 = vmatmul.mubr.f32.gmra.mrb[0].mxu0 %v1970
    %v2038 = vpop.f32.mrb[0].mxu0
    %v2039 = vadd.f32 0.0, %v2038
    %v2040 = vpop.f32.mrb[0].mxu0
    %2041 = vdwg.mxu0
    %v2043 = vsel %vm1053, %v1746, 0
    %2045 = vmatprep.subr.mxu0 0.0
    %2046 = vmatpush1.msra.mxu0 %v1043
    %2047 = vmatprep.subr.mxu0 0.0
    %2048 = vmatpush1.msra.mxu0 0.0
    %2049 = vmatprep.subr.mxu0 0.0
    %2050 = vmatpush1.msra.mxu0 0.0
    %2051 = vmatprep.subr.mxu0 0.0
    %2052 = vmatpush1.msra.mxu0 0.0
    %2053 = vmatprep.subr.mxu0 0.0
    %2054 = vmatpush1.msra.mxu0 0.0
    %2055 = vmatprep.subr.mxu0 0.0
    %2056 = vmatpush1.msra.mxu0 0.0
    %2057 = vmatprep.subr.mxu0 0.0
    %2058 = vmatpush1.msra.mxu0 0.0
    %2059 = vmatprep.subr.mxu0 0.0
    %2060 = vmatpush1.msra.mxu0 0.0
    %2061 = vmatprep.subr.mxu0 0.0
    %2062 = vmatpush1.msra.mxu0 0.0
    %2063 = vmatprep.subr.mxu0 0.0
    %2064 = vmatpush1.msra.mxu0 0.0
    %2065 = vmatprep.subr.mxu0 0.0
    %2066 = vmatpush1.msra.mxu0 0.0
    %2067 = vmatprep.subr.mxu0 0.0
    %2068 = vmatpush1.msra.mxu0 0.0
    %2069 = vmatprep.subr.mxu0 0.0
    %2070 = vmatpush1.msra.mxu0 0.0
    %2071 = vmatprep.subr.mxu0 0.0
    %2072 = vmatpush1.msra.mxu0 0.0
    %2073 = vmatprep.subr.mxu0 0.0
    %2074 = vmatpush1.msra.mxu0 0.0
    %2075 = vmatprep.subr.mxu0 0.0
    %2076 = vmatpush1.msra.mxu0 0.0
    %2077 = vmatprep.subr.mxu0 0.0
    %2078 = vmatpush1.msra.mxu0 0.0
    %2079 = vmatprep.subr.mxu0 0.0
    %2080 = vmatpush1.msra.mxu0 0.0
    %2081 = vmatprep.subr.mxu0 0.0
    %2082 = vmatpush1.msra.mxu0 0.0
    %2083 = vmatprep.subr.mxu0 0.0
    %2084 = vmatpush1.msra.mxu0 0.0
    %2085 = vmatprep.subr.mxu0 0.0
    %2086 = vmatpush1.msra.mxu0 0.0
    %2087 = vmatprep.subr.mxu0 0.0
    %2088 = vmatpush1.msra.mxu0 0.0
    %2089 = vmatprep.subr.mxu0 0.0
    %2090 = vmatpush1.msra.mxu0 0.0
    %2091 = vmatprep.subr.mxu0 0.0
    %2092 = vmatpush1.msra.mxu0 0.0
    %2093 = vmatprep.subr.mxu0 0.0
    %2094 = vmatpush1.msra.mxu0 0.0
    %2095 = vmatprep.subr.mxu0 0.0
    %2096 = vmatpush1.msra.mxu0 0.0
    %2097 = vmatprep.subr.mxu0 0.0
    %2098 = vmatpush1.msra.mxu0 0.0
    %2099 = vmatprep.subr.mxu0 0.0
    %2100 = vmatpush1.msra.mxu0 0.0
    %2101 = vmatprep.subr.mxu0 0.0
    %2102 = vmatpush1.msra.mxu0 0.0
    %2103 = vmatprep.subr.mxu0 0.0
    %2104 = vmatpush1.msra.mxu0 0.0
    %2105 = vmatprep.subr.mxu0 0.0
    %2106 = vmatpush1.msra.mxu0 0.0
    %2107 = vmatprep.subr.mxu0 0.0
    %2108 = vmatpush1.msra.mxu0 0.0
    %2109 = vmatprep.mubr.f32.mxu0 0.0
    %2110 = vmatmul.mubr.f32.gmra.mrb[0].mxu0 %v2043
    %v2111 = vpop.f32.mrb[0].mxu0
    %v2112 = vadd.f32 0.0, %v2111
    %v2113 = vpop.f32.mrb[0].mxu0
    %2114 = vdwg.mxu0
    %v2116 = vsel %vm1053, %v1747, 0
    %2118 = vmatprep.subr.mxu0 0.0
    %2119 = vmatpush1.msra.mxu0 %v1044
    %2120 = vmatprep.subr.mxu0 0.0
    %2121 = vmatpush1.msra.mxu0 0.0
    %2122 = vmatprep.subr.mxu0 0.0
    %2123 = vmatpush1.msra.mxu0 0.0
    %2124 = vmatprep.subr.mxu0 0.0
    %2125 = vmatpush1.msra.mxu0 0.0
    %2126 = vmatprep.subr.mxu0 0.0
    %2127 = vmatpush1.msra.mxu0 0.0
    %2128 = vmatprep.subr.mxu0 0.0
    %2129 = vmatpush1.msra.mxu0 0.0
    %2130 = vmatprep.subr.mxu0 0.0
    %2131 = vmatpush1.msra.mxu0 0.0
    %2132 = vmatprep.subr.mxu0 0.0
    %2133 = vmatpush1.msra.mxu0 0.0
    %2134 = vmatprep.subr.mxu0 0.0
    %2135 = vmatpush1.msra.mxu0 0.0
    %2136 = vmatprep.subr.mxu0 0.0
    %2137 = vmatpush1.msra.mxu0 0.0
    %2138 = vmatprep.subr.mxu0 0.0
    %2139 = vmatpush1.msra.mxu0 0.0
    %2140 = vmatprep.subr.mxu0 0.0
    %2141 = vmatpush1.msra.mxu0 0.0
    %2142 = vmatprep.subr.mxu0 0.0
    %2143 = vmatpush1.msra.mxu0 0.0
    %2144 = vmatprep.subr.mxu0 0.0
    %2145 = vmatpush1.msra.mxu0 0.0
    %2146 = vmatprep.subr.mxu0 0.0
    %2147 = vmatpush1.msra.mxu0 0.0
    %2148 = vmatprep.subr.mxu0 0.0
    %2149 = vmatpush1.msra.mxu0 0.0
    %2150 = vmatprep.subr.mxu0 0.0
    %2151 = vmatpush1.msra.mxu0 0.0
    %2152 = vmatprep.subr.mxu0 0.0
    %2153 = vmatpush1.msra.mxu0 0.0
    %2154 = vmatprep.subr.mxu0 0.0
    %2155 = vmatpush1.msra.mxu0 0.0
    %2156 = vmatprep.subr.mxu0 0.0
    %2157 = vmatpush1.msra.mxu0 0.0
    %2158 = vmatprep.subr.mxu0 0.0
    %2159 = vmatpush1.msra.mxu0 0.0
    %2160 = vmatprep.subr.mxu0 0.0
    %2161 = vmatpush1.msra.mxu0 0.0
    %2162 = vmatprep.subr.mxu0 0.0
    %2163 = vmatpush1.msra.mxu0 0.0
    %2164 = vmatprep.subr.mxu0 0.0
    %2165 = vmatpush1.msra.mxu0 0.0
    %2166 = vmatprep.subr.mxu0 0.0
    %2167 = vmatpush1.msra.mxu0 0.0
    %2168 = vmatprep.subr.mxu0 0.0
    %2169 = vmatpush1.msra.mxu0 0.0
    %2170 = vmatprep.subr.mxu0 0.0
    %2171 = vmatpush1.msra.mxu0 0.0
    %2172 = vmatprep.subr.mxu0 0.0
    %2173 = vmatpush1.msra.mxu0 0.0
    %2174 = vmatprep.subr.mxu0 0.0
    %2175 = vmatpush1.msra.mxu0 0.0
    %2176 = vmatprep.subr.mxu0 0.0
    %2177 = vmatpush1.msra.mxu0 0.0
    %2178 = vmatprep.subr.mxu0 0.0
    %2179 = vmatpush1.msra.mxu0 0.0
    %2180 = vmatprep.subr.mxu0 0.0
    %2181 = vmatpush1.msra.mxu0 0.0
    %2182 = vmatprep.mubr.f32.mxu0 0.0
    %2183 = vmatmul.mubr.f32.gmra.mrb[0].mxu0 %v2116
    %v2184 = vpop.f32.mrb[0].mxu0
    %v2185 = vadd.f32 0.0, %v2184
    %v2186 = vpop.f32.mrb[0].mxu0
    %2187 = vdwg.mxu0
    %v2189 = vsel %vm1053, %v1748, 0
    %2191 = vmatprep.subr.mxu0 0.0
    %2192 = vmatpush1.msra.mxu0 %v1045
    %2193 = vmatprep.subr.mxu0 0.0
    %2194 = vmatpush1.msra.mxu0 0.0
    %2195 = vmatprep.subr.mxu0 0.0
    %2196 = vmatpush1.msra.mxu0 0.0
    %2197 = vmatprep.subr.mxu0 0.0
    %2198 = vmatpush1.msra.mxu0 0.0
    %2199 = vmatprep.subr.mxu0 0.0
    %2200 = vmatpush1.msra.mxu0 0.0
    %2201 = vmatprep.subr.mxu0 0.0
    %2202 = vmatpush1.msra.mxu0 0.0
    %2203 = vmatprep.subr.mxu0 0.0
    %2204 = vmatpush1.msra.mxu0 0.0
    %2205 = vmatprep.subr.mxu0 0.0
    %2206 = vmatpush1.msra.mxu0 0.0
    %2207 = vmatprep.subr.mxu0 0.0
    %2208 = vmatpush1.msra.mxu0 0.0
    %2209 = vmatprep.subr.mxu0 0.0
    %2210 = vmatpush1.msra.mxu0 0.0
    %2211 = vmatprep.subr.mxu0 0.0
    %2212 = vmatpush1.msra.mxu0 0.0
    %2213 = vmatprep.subr.mxu0 0.0
    %2214 = vmatpush1.msra.mxu0 0.0
    %2215 = vmatprep.subr.mxu0 0.0
    %2216 = vmatpush1.msra.mxu0 0.0
    %2217 = vmatprep.subr.mxu0 0.0
    %2218 = vmatpush1.msra.mxu0 0.0
    %2219 = vmatprep.subr.mxu0 0.0
    %2220 = vmatpush1.msra.mxu0 0.0
    %2221 = vmatprep.subr.mxu0 0.0
    %2222 = vmatpush1.msra.mxu0 0.0
    %2223 = vmatprep.subr.mxu0 0.0
    %2224 = vmatpush1.msra.mxu0 0.0
    %2225 = vmatprep.subr.mxu0 0.0
    %2226 = vmatpush1.msra.mxu0 0.0
    %2227 = vmatprep.subr.mxu0 0.0
    %2228 = vmatpush1.msra.mxu0 0.0
    %2229 = vmatprep.subr.mxu0 0.0
    %2230 = vmatpush1.msra.mxu0 0.0
    %2231 = vmatprep.subr.mxu0 0.0
    %2232 = vmatpush1.msra.mxu0 0.0
    %2233 = vmatprep.subr.mxu0 0.0
    %2234 = vmatpush1.msra.mxu0 0.0
    %2235 = vmatprep.subr.mxu0 0.0
    %2236 = vmatpush1.msra.mxu0 0.0
    %2237 = vmatprep.subr.mxu0 0.0
    %2238 = vmatpush1.msra.mxu0 0.0
    %2239 = vmatprep.subr.mxu0 0.0
    %2240 = vmatpush1.msra.mxu0 0.0
    %2241 = vmatprep.subr.mxu0 0.0
    %2242 = vmatpush1.msra.mxu0 0.0
    %2243 = vmatprep.subr.mxu0 0.0
    %2244 = vmatpush1.msra.mxu0 0.0
    %2245 = vmatprep.subr.mxu0 0.0
    %2246 = vmatpush1.msra.mxu0 0.0
    %2247 = vmatprep.subr.mxu0 0.0
    %2248 = vmatpush1.msra.mxu0 0.0
    %2249 = vmatprep.subr.mxu0 0.0
    %2250 = vmatpush1.msra.mxu0 0.0
    %2251 = vmatprep.subr.mxu0 0.0
    %2252 = vmatpush1.msra.mxu0 0.0
    %2253 = vmatprep.subr.mxu0 0.0
    %2254 = vmatpush1.msra.mxu0 0.0
    %2255 = vmatprep.mubr.f32.mxu0 0.0
    %2256 = vmatmul.mubr.f32.gmra.mrb[0].mxu0 %v2189
    %v2257 = vpop.f32.mrb[0].mxu0
    %v2258 = vadd.f32 0.0, %v2257
    %v2259 = vpop.f32.mrb[0].mxu0
    %2260 = vdwg.mxu0
    %v2262 = vsel %vm1053, %v1749, 0
    %2264 = vmatprep.subr.mxu0 0.0
    %2265 = vmatpush1.msra.mxu0 %v1046
    %2266 = vmatprep.subr.mxu0 0.0
    %2267 = vmatpush1.msra.mxu0 0.0
    %2268 = vmatprep.subr.mxu0 0.0
    %2269 = vmatpush1.msra.mxu0 0.0
    %2270 = vmatprep.subr.mxu0 0.0
    %2271 = vmatpush1.msra.mxu0 0.0
    %2272 = vmatprep.subr.mxu0 0.0
    %2273 = vmatpush1.msra.mxu0 0.0
    %2274 = vmatprep.subr.mxu0 0.0
    %2275 = vmatpush1.msra.mxu0 0.0
    %2276 = vmatprep.subr.mxu0 0.0
    %2277 = vmatpush1.msra.mxu0 0.0
    %2278 = vmatprep.subr.mxu0 0.0
    %2279 = vmatpush1.msra.mxu0 0.0
    %2280 = vmatprep.subr.mxu0 0.0
    %2281 = vmatpush1.msra.mxu0 0.0
    %2282 = vmatprep.subr.mxu0 0.0
    %2283 = vmatpush1.msra.mxu0 0.0
    %2284 = vmatprep.subr.mxu0 0.0
    %2285 = vmatpush1.msra.mxu0 0.0
    %2286 = vmatprep.subr.mxu0 0.0
    %2287 = vmatpush1.msra.mxu0 0.0
    %2288 = vmatprep.subr.mxu0 0.0
    %2289 = vmatpush1.msra.mxu0 0.0
    %2290 = vmatprep.subr.mxu0 0.0
    %2291 = vmatpush1.msra.mxu0 0.0
    %2292 = vmatprep.subr.mxu0 0.0
    %2293 = vmatpush1.msra.mxu0 0.0
    %2294 = vmatprep.subr.mxu0 0.0
    %2295 = vmatpush1.msra.mxu0 0.0
    %2296 = vmatprep.subr.mxu0 0.0
    %2297 = vmatpush1.msra.mxu0 0.0
    %2298 = vmatprep.subr.mxu0 0.0
    %2299 = vmatpush1.msra.mxu0 0.0
    %2300 = vmatprep.subr.mxu0 0.0
    %2301 = vmatpush1.msra.mxu0 0.0
    %2302 = vmatprep.subr.mxu0 0.0
    %2303 = vmatpush1.msra.mxu0 0.0
    %2304 = vmatprep.subr.mxu0 0.0
    %2305 = vmatpush1.msra.mxu0 0.0
    %2306 = vmatprep.subr.mxu0 0.0
    %2307 = vmatpush1.msra.mxu0 0.0
    %2308 = vmatprep.subr.mxu0 0.0
    %2309 = vmatpush1.msra.mxu0 0.0
    %2310 = vmatprep.subr.mxu0 0.0
    %2311 = vmatpush1.msra.mxu0 0.0
    %2312 = vmatprep.subr.mxu0 0.0
    %2313 = vmatpush1.msra.mxu0 0.0
    %2314 = vmatprep.subr.mxu0 0.0
    %2315 = vmatpush1.msra.mxu0 0.0
    %2316 = vmatprep.subr.mxu0 0.0
    %2317 = vmatpush1.msra.mxu0 0.0
    %2318 = vmatprep.subr.mxu0 0.0
    %2319 = vmatpush1.msra.mxu0 0.0
    %2320 = vmatprep.subr.mxu0 0.0
    %2321 = vmatpush1.msra.mxu0 0.0
    %2322 = vmatprep.subr.mxu0 0.0
    %2323 = vmatpush1.msra.mxu0 0.0
    %2324 = vmatprep.subr.mxu0 0.0
    %2325 = vmatpush1.msra.mxu0 0.0
    %2326 = vmatprep.subr.mxu0 0.0
    %2327 = vmatpush1.msra.mxu0 0.0
    %2328 = vmatprep.mubr.f32.mxu0 0.0
    %2329 = vmatmul.mubr.f32.gmra.mrb[0].mxu0 %v2262
    %v2330 = vpop.f32.mrb[0].mxu0
    %v2331 = vadd.f32 0.0, %v2330
    %v2332 = vpop.f32.mrb[0].mxu0
    %2333 = vdwg.mxu0
    %v2334 = vcombine.low %v1820, %v1966
    %v2335 = vcombine.high %v1820, %v1966
    %v2337 = vunpack.c.l.s4 1983009808
    %v2338 = vunpack.c.0.s8 %v2337
    %v2339 = vlaneseq
    %v2340 = vshrl.u32 %v2339, 7
    %v2341 = vsub.s32 %v2338, %v2340
    %v2342 = vrot.slane %v2334, %v2341
    %v2344 = vunpack.c.l.s4 1983009808
    %v2345 = vunpack.c.0.s8 %v2344
    %v2346 = vlaneseq
    %v2347 = vshrl.u32 %v2346, 7
    %v2348 = vsub.s32 %v2345, %v2347
    %v2349 = vrot.slane %v2335, %v2348
    %v2350 = vcombine.low %v1893, %v2039
    %v2351 = vcombine.high %v1893, %v2039
    %v2353 = vunpack.c.l.s4 1983009808
    %v2354 = vunpack.c.0.s8 %v2353
    %v2355 = vlaneseq
    %v2356 = vshrl.u32 %v2355, 7
    %v2357 = vsub.s32 %v2354, %v2356
    %v2358 = vrot.slane %v2350, %v2357
    %v2360 = vunpack.c.l.s4 1983009808
    %v2361 = vunpack.c.0.s8 %v2360
    %v2362 = vlaneseq
    %v2363 = vshrl.u32 %v2362, 7
    %v2364 = vsub.s32 %v2361, %v2363
    %v2365 = vrot.slane %v2351, %v2364
    %v2366 = vcombine.low %v2342, %v2358
    %v2367 = vcombine.high %v2342, %v2358
    %v2369 = vunpack.c.l.s4 1934713408
    %v2370 = vunpack.c.0.s8 %v2369
    %v2371 = vlaneseq
    %v2372 = vshrl.u32 %v2371, 7
    %v2373 = vsub.s32 %v2370, %v2372
    %v2374 = vrot.slane %v2366, %v2373
    %v2376 = vunpack.c.l.s4 1934713408
    %v2377 = vunpack.c.0.s8 %v2376
    %v2378 = vlaneseq
    %v2379 = vshrl.u32 %v2378, 7
    %v2380 = vsub.s32 %v2377, %v2379
    %v2381 = vrot.slane %v2367, %v2380
    %v2382 = vcombine.low %v2349, %v2365
    %v2383 = vcombine.high %v2349, %v2365
    %v2385 = vunpack.c.l.s4 1934713408
    %v2386 = vunpack.c.0.s8 %v2385
    %v2387 = vlaneseq
    %v2388 = vshrl.u32 %v2387, 7
    %v2389 = vsub.s32 %v2386, %v2388
    %v2390 = vrot.slane %v2382, %v2389
    %v2392 = vunpack.c.l.s4 1934713408
    %v2393 = vunpack.c.0.s8 %v2392
    %v2394 = vlaneseq
    %v2395 = vshrl.u32 %v2394, 7
    %v2396 = vsub.s32 %v2393, %v2395
    %v2397 = vrot.slane %v2383, %v2396
    %v2398 = vcombine.high %v2374, 0.0
    %v2399 = vcombine.high %v2381, 0.0
    %v2400 = vcombine.high %v2390, 0.0
    %v2401 = vcombine.high %v2397, 0.0
    %v2402 = vcombine.low %v2112, %v2258
    %v2403 = vcombine.high %v2112, %v2258
    %v2405 = vunpack.c.l.s4 1983009808
    %v2406 = vunpack.c.0.s8 %v2405
    %v2407 = vlaneseq
    %v2408 = vshrl.u32 %v2407, 7
    %v2409 = vsub.s32 %v2406, %v2408
    %v2410 = vrot.slane %v2402, %v2409
    %v2412 = vunpack.c.l.s4 1983009808
    %v2413 = vunpack.c.0.s8 %v2412
    %v2414 = vlaneseq
    %v2415 = vshrl.u32 %v2414, 7
    %v2416 = vsub.s32 %v2413, %v2415
    %v2417 = vrot.slane %v2403, %v2416
    %v2418 = vcombine.low %v2185, %v2331
    %v2419 = vcombine.high %v2185, %v2331
    %v2421 = vunpack.c.l.s4 1983009808
    %v2422 = vunpack.c.0.s8 %v2421
    %v2423 = vlaneseq
    %v2424 = vshrl.u32 %v2423, 7
    %v2425 = vsub.s32 %v2422, %v2424
    %v2426 = vrot.slane %v2418, %v2425
    %v2428 = vunpack.c.l.s4 1983009808
    %v2429 = vunpack.c.0.s8 %v2428
    %v2430 = vlaneseq
    %v2431 = vshrl.u32 %v2430, 7
    %v2432 = vsub.s32 %v2429, %v2431
    %v2433 = vrot.slane %v2419, %v2432
    %v2434 = vcombine.low %v2410, %v2426
    %v2435 = vcombine.high %v2410, %v2426
    %v2437 = vunpack.c.l.s4 1934713408
    %v2438 = vunpack.c.0.s8 %v2437
    %v2439 = vlaneseq
    %v2440 = vshrl.u32 %v2439, 7
    %v2441 = vsub.s32 %v2438, %v2440
    %v2442 = vrot.slane %v2434, %v2441
    %v2444 = vunpack.c.l.s4 1934713408
    %v2445 = vunpack.c.0.s8 %v2444
    %v2446 = vlaneseq
    %v2447 = vshrl.u32 %v2446, 7
    %v2448 = vsub.s32 %v2445, %v2447
    %v2449 = vrot.slane %v2435, %v2448
    %v2450 = vcombine.low %v2417, %v2433
    %v2451 = vcombine.high %v2417, %v2433
    %v2453 = vunpack.c.l.s4 1934713408
    %v2454 = vunpack.c.0.s8 %v2453
    %v2455 = vlaneseq
    %v2456 = vshrl.u32 %v2455, 7
    %v2457 = vsub.s32 %v2454, %v2456
    %v2458 = vrot.slane %v2450, %v2457
    %v2460 = vunpack.c.l.s4 1934713408
    %v2461 = vunpack.c.0.s8 %v2460
    %v2462 = vlaneseq
    %v2463 = vshrl.u32 %v2462, 7
    %v2464 = vsub.s32 %v2461, %v2463
    %v2465 = vrot.slane %v2451, %v2464
    %v2466 = vcombine.high %v2442, 0.0
    %v2467 = vcombine.high %v2449, 0.0
    %v2468 = vcombine.high %v2458, 0.0
    %v2469 = vcombine.high %v2465, 0.0
    %v2470 = vcombine.low %v2374, %v2381
    %v2472 = vunpack.c.l.s4 1983009808
    %v2473 = vunpack.c.0.s8 %v2472
    %v2474 = vlaneseq
    %v2475 = vshrl.u32 %v2474, 7
    %v2476 = vsub.s32 %v2473, %v2475
    %v2477 = vrot.slane %v2470, %v2476
    %v2478 = vcombine.low %v2398, %v2399
    %v2480 = vunpack.c.l.s4 1983009808
    %v2481 = vunpack.c.0.s8 %v2480
    %v2482 = vlaneseq
    %v2483 = vshrl.u32 %v2482, 7
    %v2484 = vsub.s32 %v2481, %v2483
    %v2485 = vrot.slane %v2478, %v2484
    %v2486 = vcombine.low %v2390, %v2397
    %v2488 = vunpack.c.l.s4 1983009808
    %v2489 = vunpack.c.0.s8 %v2488
    %v2490 = vlaneseq
    %v2491 = vshrl.u32 %v2490, 7
    %v2492 = vsub.s32 %v2489, %v2491
    %v2493 = vrot.slane %v2486, %v2492
    %v2494 = vcombine.low %v2400, %v2401
    %v2496 = vunpack.c.l.s4 1983009808
    %v2497 = vunpack.c.0.s8 %v2496
    %v2498 = vlaneseq
    %v2499 = vshrl.u32 %v2498, 7
    %v2500 = vsub.s32 %v2497, %v2499
    %v2501 = vrot.slane %v2494, %v2500
    %v2502 = vcombine.low %v2477, %v2485
    %v2503 = vcombine.high %v2477, %v2485
    %v2505 = vunpack.c.l.s4 1934713408
    %v2506 = vunpack.c.0.s8 %v2505
    %v2507 = vlaneseq
    %v2508 = vshrl.u32 %v2507, 7
    %v2509 = vsub.s32 %v2506, %v2508
    %v2510 = vrot.slane %v2502, %v2509
    %v2512 = vunpack.c.l.s4 1934713408
    %v2513 = vunpack.c.0.s8 %v2512
    %v2514 = vlaneseq
    %v2515 = vshrl.u32 %v2514, 7
    %v2516 = vsub.s32 %v2513, %v2515
    %v2517 = vrot.slane %v2503, %v2516
    %v2518 = vcombine.low %v2493, %v2501
    %v2519 = vcombine.high %v2493, %v2501
    %v2521 = vunpack.c.l.s4 1934713408
    %v2522 = vunpack.c.0.s8 %v2521
    %v2523 = vlaneseq
    %v2524 = vshrl.u32 %v2523, 7
    %v2525 = vsub.s32 %v2522, %v2524
    %v2526 = vrot.slane %v2518, %v2525
    %v2528 = vunpack.c.l.s4 1934713408
    %v2529 = vunpack.c.0.s8 %v2528
    %v2530 = vlaneseq
    %v2531 = vshrl.u32 %v2530, 7
    %v2532 = vsub.s32 %v2529, %v2531
    %v2533 = vrot.slane %v2519, %v2532
    %v2534 = vcombine.low %v2510, %v2526
    %v2535 = vcombine.high %v2510, %v2526
    %v2536 = vcombine.low %v2517, %v2533
    %v2537 = vcombine.high %v2517, %v2533
    %v2538 = vcombine.low %v2442, %v2449
    %v2540 = vunpack.c.l.s4 1983009808
    %v2541 = vunpack.c.0.s8 %v2540
    %v2542 = vlaneseq
    %v2543 = vshrl.u32 %v2542, 7
    %v2544 = vsub.s32 %v2541, %v2543
    %v2545 = vrot.slane %v2538, %v2544
    %v2546 = vcombine.low %v2466, %v2467
    %v2548 = vunpack.c.l.s4 1983009808
    %v2549 = vunpack.c.0.s8 %v2548
    %v2550 = vlaneseq
    %v2551 = vshrl.u32 %v2550, 7
    %v2552 = vsub.s32 %v2549, %v2551
    %v2553 = vrot.slane %v2546, %v2552
    %v2554 = vcombine.low %v2458, %v2465
    %v2556 = vunpack.c.l.s4 1983009808
    %v2557 = vunpack.c.0.s8 %v2556
    %v2558 = vlaneseq
    %v2559 = vshrl.u32 %v2558, 7
    %v2560 = vsub.s32 %v2557, %v2559
    %v2561 = vrot.slane %v2554, %v2560
    %v2562 = vcombine.low %v2468, %v2469
    %v2564 = vunpack.c.l.s4 1983009808
    %v2565 = vunpack.c.0.s8 %v2564
    %v2566 = vlaneseq
    %v2567 = vshrl.u32 %v2566, 7
    %v2568 = vsub.s32 %v2565, %v2567
    %v2569 = vrot.slane %v2562, %v2568
    %v2570 = vcombine.low %v2545, %v2553
    %v2571 = vcombine.high %v2545, %v2553
    %v2573 = vunpack.c.l.s4 1934713408
    %v2574 = vunpack.c.0.s8 %v2573
    %v2575 = vlaneseq
    %v2576 = vshrl.u32 %v2575, 7
    %v2577 = vsub.s32 %v2574, %v2576
    %v2578 = vrot.slane %v2570, %v2577
    %v2580 = vunpack.c.l.s4 1934713408
    %v2581 = vunpack.c.0.s8 %v2580
    %v2582 = vlaneseq
    %v2583 = vshrl.u32 %v2582, 7
    %v2584 = vsub.s32 %v2581, %v2583
    %v2585 = vrot.slane %v2571, %v2584
    %v2586 = vcombine.low %v2561, %v2569
    %v2587 = vcombine.high %v2561, %v2569
    %v2589 = vunpack.c.l.s4 1934713408
    %v2590 = vunpack.c.0.s8 %v2589
    %v2591 = vlaneseq
    %v2592 = vshrl.u32 %v2591, 7
    %v2593 = vsub.s32 %v2590, %v2592
    %v2594 = vrot.slane %v2586, %v2593
    %v2596 = vunpack.c.l.s4 1934713408
    %v2597 = vunpack.c.0.s8 %v2596
    %v2598 = vlaneseq
    %v2599 = vshrl.u32 %v2598, 7
    %v2600 = vsub.s32 %v2597, %v2599
    %v2601 = vrot.slane %v2587, %v2600
    %v2602 = vcombine.low %v2578, %v2594
    %v2603 = vcombine.high %v2578, %v2594
    %v2604 = vcombine.low %v2585, %v2601
    %v2605 = vcombine.high %v2585, %v2601
    %2608 = vrot.lane.b32.xlu0 %v2535, 8
    %v2609 = vpop.permute.xlu0 %2608
    %2610 = vrot.lane.b32.xlu0 %v2603, 8
    %v2611 = vpop.permute.xlu0 %2610
    %2616 = vrot.lane.b32.xlu0 %v2536, 16
    %v2617 = vpop.permute.xlu0 %2616
    %2618 = vrot.lane.b32.xlu0 %v2604, 16
    %v2619 = vpop.permute.xlu0 %2618
    %2624 = vrot.lane.b32.xlu0 %v2537, 24
    %v2625 = vpop.permute.xlu0 %2624
    %2626 = vrot.lane.b32.xlu0 %v2605, 24
    %v2627 = vpop.permute.xlu0 %2626
    %v2630 = vsel %vm1053, %v2534, %v2609
    %v2631 = vsel %vm1053, %v2602, %v2611
    %vm2632 = vcmask 130048
    %v2633 = vsel %vm2632, %v2630, %v2617
    %v2634 = vsel %vm2632, %v2631, %v2619
    %vm2635 = vcmask 195584
    %v2636 = vsel %vm2635, %v2633, %v2625
    %v2637 = vsel %vm2635, %v2634, %v2627
    %v2638 = vld [vmem:[#allocation7] sm:$0xff]
    %v2639 = vld [vmem:[#allocation7 + $0x8] sm:$0xff]
    %v2640 = vld [vmem:[#allocation7 + $0x10] sm:$0xff]
    %v2641 = vld [vmem:[#allocation7 + $0x18] sm:$0xff]
    %v2642 = vld [vmem:[%s4] sm:$0x1]
    %v2644 = vlaneseq
    %v2645 = vshrl.u32 %v2644, 7
    %v2646 = vsub.s32 0, %v2645
    %v2647 = vrot.slane %v2642, %v2646
    %v2650 = vsel %vm78, %v2636, 0
    %v2653 = vsel %vm78, %v2637, 0
    %2655 = vmatprep.subr.mxu0 0.0
    %2656 = vmatpush1.msra.mxu0 %v2638
    %2657 = vmatprep.subr.mxu0 0.0
    %2658 = vmatpush1.msra.mxu0 %v2639
    %2659 = vmatprep.subr.mxu0 0.0
    %2660 = vmatpush1.msra.mxu0 %v2640
    %2661 = vmatprep.subr.mxu0 0.0
    %2662 = vmatpush1.msra.mxu0 %v2641
    %2663 = vmatprep.subr.mxu0 0.0
    %2664 = vmatpush1.msra.mxu0 0.0
    %2665 = vmatprep.subr.mxu0 0.0
    %2666 = vmatpush1.msra.mxu0 0.0
    %2667 = vmatprep.subr.mxu0 0.0
    %2668 = vmatpush1.msra.mxu0 0.0
    %2669 = vmatprep.subr.mxu0 0.0
    %2670 = vmatpush1.msra.mxu0 0.0
    %2671 = vmatprep.subr.mxu0 0.0
    %2672 = vmatpush1.msra.mxu0 0.0
    %2673 = vmatprep.subr.mxu0 0.0
    %2674 = vmatpush1.msra.mxu0 0.0
    %2675 = vmatprep.subr.mxu0 0.0
    %2676 = vmatpush1.msra.mxu0 0.0
    %2677 = vmatprep.subr.mxu0 0.0
    %2678 = vmatpush1.msra.mxu0 0.0
    %2679 = vmatprep.subr.mxu0 0.0
    %2680 = vmatpush1.msra.mxu0 0.0
    %2681 = vmatprep.subr.mxu0 0.0
    %2682 = vmatpush1.msra.mxu0 0.0
    %2683 = vmatprep.subr.mxu0 0.0
    %2684 = vmatpush1.msra.mxu0 0.0
    %2685 = vmatprep.subr.mxu0 0.0
    %2686 = vmatpush1.msra.mxu0 0.0
    %2687 = vmatprep.subr.mxu0 0.0
    %2688 = vmatpush1.msra.mxu0 0.0
    %2689 = vmatprep.subr.mxu0 0.0
    %2690 = vmatpush1.msra.mxu0 0.0
    %2691 = vmatprep.subr.mxu0 0.0
    %2692 = vmatpush1.msra.mxu0 0.0
    %2693 = vmatprep.subr.mxu0 0.0
    %2694 = vmatpush1.msra.mxu0 0.0
    %2695 = vmatprep.subr.mxu0 0.0
    %2696 = vmatpush1.msra.mxu0 0.0
    %2697 = vmatprep.subr.mxu0 0.0
    %2698 = vmatpush1.msra.mxu0 0.0
    %2699 = vmatprep.subr.mxu0 0.0
    %2700 = vmatpush1.msra.mxu0 0.0
    %2701 = vmatprep.subr.mxu0 0.0
    %2702 = vmatpush1.msra.mxu0 0.0
    %2703 = vmatprep.subr.mxu0 0.0
    %2704 = vmatpush1.msra.mxu0 0.0
    %2705 = vmatprep.subr.mxu0 0.0
    %2706 = vmatpush1.msra.mxu0 0.0
    %2707 = vmatprep.subr.mxu0 0.0
    %2708 = vmatpush1.msra.mxu0 0.0
    %2709 = vmatprep.subr.mxu0 0.0
    %2710 = vmatpush1.msra.mxu0 0.0
    %2711 = vmatprep.subr.mxu0 0.0
    %2712 = vmatpush1.msra.mxu0 0.0
    %2713 = vmatprep.subr.mxu0 0.0
    %2714 = vmatpush1.msra.mxu0 0.0
    %2715 = vmatprep.subr.mxu0 0.0
    %2716 = vmatpush1.msra.mxu0 0.0
    %2717 = vmatprep.subr.mxu0 0.0
    %2718 = vmatpush1.msra.mxu0 0.0
    %2719 = vmatprep.mubr.f32.mxu0 0.0
    %2720 = vmatmul.mubr.f32.gmra.mrb[0].mxu0 %v2650
    %v2721 = vpop.f32.mrb[0].mxu0
    %v2722 = vadd.f32 %v2647, %v2721
    %v2723 = vpop.f32.mrb[0].mxu0
    %2724 = vmatprep.mubr.f32.mxu0 0.0
    %2725 = vmatmul.mubr.f32.gmra.mrb[0].mxu0 %v2653
    %v2726 = vpop.f32.mrb[0].mxu0
    %v2727 = vadd.f32 %v2647, %v2726
    %v2728 = vpop.f32.mrb[0].mxu0
    %2729 = vdwg.mxu0
    %2730 = vst.msk [vmem:[#allocation8] sm:$0xff] %vm78, %v2722
    %2731 = vst.msk [vmem:[#allocation8 + $0x8] sm:$0xff] %vm78, %v2727
    // Predicated region
    $region34: #{tpu_custom_call.1} parent=1 // pred_check
      _
    $region35: #{tpu_custom_call.1} parent=1 // pred_check_branch
      %2733 = sbr.rel (0) target = $region37
    $region36: #{tpu_custom_call.1} parent=1 // pred_region
      %s2735 = ssub.s32 256, 256
      %2736 = vsyncadd [#allocation4], %s2735
      %s2737 = sshll.u32 [#allocation8], 4
      %s2738 = int_to_ptr.vmem [resolvable:$true] %s2737
      %2743 = dma.vmem_to_hbm [thread:$0]  %s2738, 256, %s5, [#allocation4], 128, 128, 8
    $region37: #{tpu_custom_call.1} parent=1 // pred_fallthru
      _
    // Predicated region
    $region38: #{tpu_custom_call.1} parent=1 // pred_check
      _
    $region39: #{tpu_custom_call.1} parent=1 // pred_check_branch
      %2745 = sbr.rel (0) target = $region41
    $region40: #{tpu_custom_call.1} parent=1 // pred_region
      %s2747 = ssub.s32 256, 256
      %2748 = vsyncadd [#allocation10], %s2747
      %s2749 = sshll.u32 [#allocation9], 4
      %s2750 = int_to_ptr.vmem [resolvable:$true] %s2749
      %2755 = dma.vmem_to_hbm [thread:$0]  %s2750, 256, %s6, [#allocation10], 128, 128, 8
    $region41: #{tpu_custom_call.1} parent=1 // pred_fallthru
      _
    // Predicated region
    $region42: #{tpu_custom_call.1} parent=1 // pred_check
      _
    $region43: #{tpu_custom_call.1} parent=1 // pred_check_branch
      %2757 = sbr.rel (0) target = $region45
    $region44: #{tpu_custom_call.1} parent=1 // pred_region
      %2758 = dma.done [#allocation4], 256
    $region45: #{tpu_custom_call.1} parent=1 // pred_fallthru
      _
    // Predicated region
    $region46: #{tpu_custom_call.1} parent=1 // pred_check
      _
    $region47: #{tpu_custom_call.1} parent=1 // pred_check_branch
      %2760 = sbr.rel (0) target = $region49
    $region48: #{tpu_custom_call.1} parent=1 // pred_region
      %2761 = dma.done [#allocation10], 256
    $region49: #{tpu_custom_call.1} parent=1 // pred_fallthru
      _
    %2762 = vsyncpa [#allocation3], 1
    %2763 = vsyncpa [#allocation6], 1
    %2764 = vsyncpa [#allocation4], 1
    %2765 = vsyncpa [#allocation10], 1

</llo_original>
